<compile_context>
chip_gen: v7x
topology: tpu7x:2x2x1
jax: 0.10.0
libtpu: 0.0.40
codegen_flags: <defaults>
</compile_context>

<pallas_src>
import jax
import jax.numpy as jnp
from jax.experimental import pallas as pl
from jax.experimental.pallas import tpu as pltpu

BATCH = 512          # batch_size // num_gpus, hard-coded in the module's view()
TB = 128             # batch tile per grid step (4 steps)
IN_FEATURES = 784    # 1 * 28 * 28
MIDDLE = 200
EPS = 1e-5
NEG_SLOPE = 0.01     # nn.LeakyReLU default


def discriminator_kernel(x_ref, w1_ref, b1_ref, w2t_ref, gamma_ref, beta_ref,
                         o_ref, z_ref, s1_ref, s2_ref):
    i = pl.program_id(0)
    nb = pl.num_programs(0)

    # ----- init BN-statistic accumulators on the first tile ------------------
    @pl.when(i == 0)
    def _():
        s1_ref[...] = jnp.zeros_like(s1_ref)
        s2_ref[...] = jnp.zeros_like(s2_ref)

    # ----- layer1: fc1 (bf16 MXU, f32 accum) + LeakyReLU (f32 VPU) ----------
    h = jnp.dot(x_ref[...], w1_ref[...],
                preferred_element_type=jnp.float32)        # (TB, 200) f32
    h = h + b1_ref[...]
    h = jnp.where(h > 0, h, NEG_SLOPE * h)

    # ----- layer2 fc2 as VPU multiply + XLU lane-reduce ----------------------
    # w2 is passed transposed as (1, 200).  b2 is intentionally omitted: it is
    # cancelled exactly by the training-mode BatchNorm mean subtraction.
    z = jnp.sum(h * w2t_ref[...], axis=-1, keepdims=True)  # (TB, 1) f32

    # Stash z for the finalize step; accumulate one-pass BN statistics.
    start = pl.multiple_of(i * TB, TB)
    z_ref[pl.ds(start, TB), :] = z
    s1_ref[...] += jnp.sum(z, keepdims=True)               # (1, 1)
    s2_ref[...] += jnp.sum(z * z, keepdims=True)           # (1, 1)

    # ----- finalize: BatchNorm2d(1) (train mode) + Sigmoid, full store -------
    @pl.when(i == nb - 1)
    def _():
        inv_b = 1.0 / BATCH
        mean = s1_ref[...] * inv_b                          # (1, 1)
        var = s2_ref[...] * inv_b - mean * mean             # biased variance
        gamma = gamma_ref[0, 0]
        beta = beta_ref[0, 0]
        zn = (z_ref[...] - mean) * jax.lax.rsqrt(var + EPS) * gamma + beta
        o_ref[...] = 1.0 / (1.0 + jnp.exp(-zn))             # sigmoid, (B, 1)


def discriminator_forward(x_nchw, w1, b1, w2, b2, gamma, beta):
    del b2  # exactly cancelled by BatchNorm's batch-mean subtraction
    # Flatten exactly like torch .view(batch, -1)  (row-major / C-order).
    x2d = x_nchw.reshape(BATCH, -1).astype(jnp.bfloat16)    # (512, 784) bf16
    w1_bf = w1.astype(jnp.bfloat16)                         # (784, 200) bf16
    b1_row = b1.reshape(1, MIDDLE).astype(jnp.float32)
    w2t = w2.reshape(MIDDLE, 1).T.astype(jnp.float32)       # (1, 200)
    gamma2 = gamma.reshape(1, 1).astype(jnp.float32)
    beta2 = beta.reshape(1, 1).astype(jnp.float32)

    smem = pl.BlockSpec(memory_space=pltpu.MemorySpace.SMEM)
    grid_spec = pltpu.PrefetchScalarGridSpec(
        num_scalar_prefetch=0,
        grid=(BATCH // TB,),
        in_specs=[
            pl.BlockSpec((TB, IN_FEATURES), lambda i: (i, 0)),    # x tile
            pl.BlockSpec((IN_FEATURES, MIDDLE), lambda i: (0, 0)),  # w1 resident
            pl.BlockSpec((1, MIDDLE), lambda i: (0, 0)),          # b1 resident
            pl.BlockSpec((1, MIDDLE), lambda i: (0, 0)),          # w2^T resident
            smem,                                                 # gamma scalar
            smem,                                                 # beta scalar
        ],
        out_specs=pl.BlockSpec((BATCH, 1), lambda i: (0, 0)),     # resident
        scratch_shapes=[
            pltpu.VMEM((BATCH, 1), jnp.float32),   # z buffer
            pltpu.VMEM((1, 1), jnp.float32),       # sum(z)
            pltpu.VMEM((1, 1), jnp.float32),       # sum(z*z)
        ],
    )

    cost = pl.CostEstimate(
        flops=2 * BATCH * IN_FEATURES * MIDDLE + 4 * BATCH * MIDDLE,
        transcendentals=BATCH,
        bytes_accessed=(x2d.size * 2 + w1_bf.size * 2
                        + (b1_row.size + w2t.size + BATCH) * 4),
    )

    return pl.pallas_call(
        discriminator_kernel,
        out_shape=jax.ShapeDtypeStruct((BATCH, 1), jnp.float32),
        grid_spec=grid_spec,
        compiler_params=pltpu.CompilerParams(
            dimension_semantics=("arbitrary",)),
        cost_estimate=cost,
    )(x2d, w1_bf, b1_row, w2t, gamma2, beta2)


def init_params(key):
    """Deterministic init mimicking PyTorch nn.Linear defaults
    (U(-1/sqrt(fan_in), 1/sqrt(fan_in))) and BatchNorm defaults (gamma=1, beta=0)."""
    k1, k2, k3, k4 = jax.random.split(key, 4)
    bound1 = 1.0 / jnp.sqrt(IN_FEATURES)
    bound2 = 1.0 / jnp.sqrt(MIDDLE)
    w1 = jax.random.uniform(k1, (IN_FEATURES, MIDDLE), jnp.float32,
                            -bound1, bound1)
    b1 = jax.random.uniform(k2, (1, MIDDLE), jnp.float32, -bound1, bound1)
    w2 = jax.random.uniform(k3, (MIDDLE, 1), jnp.float32, -bound2, bound2)
    b2 = jax.random.uniform(k4, (1, 1), jnp.float32, -bound2, bound2)
    gamma = jnp.ones((1, 1), jnp.float32)
    beta = jnp.zeros((1, 1), jnp.float32)
    return w1, b1, w2, b2, gamma, beta


def reference_forward(x_nchw, w1, b1, w2, b2, gamma, beta):
    """Pure-JAX reference. The fc1 inputs are rounded to bf16 (as the kernel
    feeds the MXU) so the comparison isolates kernel correctness; the rest of
    the math (incl. b2 and two-pass variance) follows the PyTorch module."""
    x = x_nchw.reshape(BATCH, -1).astype(jnp.bfloat16).astype(jnp.float32)
    w1f = w1.astype(jnp.bfloat16).astype(jnp.float32)
    h = x @ w1f + b1
    h = jnp.where(h > 0, h, NEG_SLOPE * h)
    z = h @ w2 + b2
    mean = jnp.mean(z, axis=0, keepdims=True)
    var = jnp.mean((z - mean) ** 2, axis=0, keepdims=True)
    zn = (z - mean) / jnp.sqrt(var + EPS) * gamma + beta
    return jax.nn.sigmoid(zn)


if __name__ == "__main__":
    key = jax.random.PRNGKey(0)
    kx, kp = jax.random.split(key)

    # MNIST-like input, NCHW; batch fixed by the module's hard-coded view().
    x = jax.random.normal(kx, (BATCH, 1, 28, 28), dtype=jnp.float32)
    params = init_params(kp)

    out = discriminator_forward(x, *params)
    out = jax.block_until_ready(out)

    ref = reference_forward(x, *params)
    assert out.shape == (BATCH, 1)
    assert bool(jnp.all(jnp.isfinite(out)))
    assert jnp.allclose(out, ref, atol=1e-4, rtol=1e-4), "mismatch vs JAX reference"

    print("KERNEL_OK")
</pallas_src>

<mosaic_0001>
module attributes {stable_mosaic.version = 11 : i64} {
  func.func @discriminator_kernel(%arg0: i32, %arg1: memref<128x784xbf16, #tpu.memory_space<vmem>>, %arg2: memref<784x200xbf16, #tpu.memory_space<vmem>>, %arg3: memref<1x200xf32, #tpu.memory_space<vmem>>, %arg4: memref<1x200xf32, #tpu.memory_space<vmem>>, %arg5: memref<1x1xf32, #tpu.memory_space<smem>>, %arg6: memref<1x1xf32, #tpu.memory_space<smem>>, %arg7: memref<512x1xf32, #tpu.memory_space<vmem>>, %arg8: memref<512x1xf32, #tpu.memory_space<vmem>>, %arg9: memref<1x1xf32, #tpu.memory_space<vmem>>, %arg10: memref<1x1xf32, #tpu.memory_space<vmem>>) attributes {dimension_semantics = [#tpu.dimension_semantics<arbitrary>], iteration_bounds = array<i64: 4>, scalar_prefetch = 0 : i64, scratch_operands = 3 : i64, tpu.core_type = #tpu.core_type<tc>, window_params = [{transform_indices = @transform_0, window_bounds = array<i64: 128, 784>}, {pipeline_mode = #tpu.pipeline_mode<synchronous>, transform_indices = @transform_1, window_bounds = array<i64: 784, 200>}, {pipeline_mode = #tpu.pipeline_mode<synchronous>, transform_indices = @transform_2, window_bounds = array<i64: 1, 200>}, {pipeline_mode = #tpu.pipeline_mode<synchronous>, transform_indices = @transform_3, window_bounds = array<i64: 1, 200>}, {transform_indices = @transform_4, window_bounds = array<i64: 1, 1>}, {transform_indices = @transform_5, window_bounds = array<i64: 1, 1>}, {pipeline_mode = #tpu.pipeline_mode<synchronous>, transform_indices = @transform_6, window_bounds = array<i64: 512, 1>}]} {
    %c0_i32 = arith.constant 0 : i32
    %0 = arith.cmpi eq, %arg0, %c0_i32 : i32
    %1 = arith.extui %0 : i1 to i32
    %c0_i32_0 = arith.constant 0 : i32
    %2 = arith.cmpi ne, %1, %c0_i32_0 : i32
    scf.if %2 {
      %cst_23 = arith.constant 0.000000e+00 : f32
      %43 = vector.broadcast %cst_23 : f32 to vector<1x1xf32>
      %c0_24 = arith.constant 0 : index
      %c0_25 = arith.constant 0 : index
      %44 = vector.load %arg9[%c0_24, %c0_25] : memref<1x1xf32, #tpu.memory_space<vmem>>, vector<1x1xf32>
      tpu.vector_store %arg9[%c0_24, %c0_25], %43 {strides = array<i32>} : memref<1x1xf32, #tpu.memory_space<vmem>>, vector<1x1xf32>,
      %cst_26 = arith.constant 0.000000e+00 : f32
      %45 = vector.broadcast %cst_26 : f32 to vector<1x1xf32>
      %c0_27 = arith.constant 0 : index
      %c0_28 = arith.constant 0 : index
      %46 = vector.load %arg10[%c0_27, %c0_28] : memref<1x1xf32, #tpu.memory_space<vmem>>, vector<1x1xf32>
      tpu.vector_store %arg10[%c0_27, %c0_28], %45 {strides = array<i32>} : memref<1x1xf32, #tpu.memory_space<vmem>>, vector<1x1xf32>,
    } else {
    }
    %c0 = arith.constant 0 : index
    %c0_1 = arith.constant 0 : index
    %3 = vector.load %arg1[%c0, %c0_1] : memref<128x784xbf16, #tpu.memory_space<vmem>>, vector<128x784xbf16>
    %c0_2 = arith.constant 0 : index
    %c0_3 = arith.constant 0 : index
    %4 = vector.load %arg2[%c0_2, %c0_3] : memref<784x200xbf16, #tpu.memory_space<vmem>>, vector<784x200xbf16>
    %cst = arith.constant dense<0.000000e+00> : vector<128x200xf32>
    %5 = tpu.matmul %3, %4, %cst {dimension_numbers = #tpu.dot_dimension_numbers<[1], [0], [0], [1], [0, 0, 1, 1], [], []>} : vector<128x784xbf16>, vector<784x200xbf16>, vector<128x200xf32> -> vector<128x200xf32>
    %c0_4 = arith.constant 0 : index
    %c0_5 = arith.constant 0 : index
    %6 = vector.load %arg3[%c0_4, %c0_5] : memref<1x200xf32, #tpu.memory_space<vmem>>, vector<1x200xf32>
    %7 = vector.broadcast %6 : vector<1x200xf32> to vector<128x200xf32>
    %8 = arith.addf %5, %7 : vector<128x200xf32>
    %cst_6 = arith.constant 0.000000e+00 : f32
    %9 = vector.broadcast %cst_6 : f32 to vector<128x200xf32>
    %10 = arith.cmpf ogt, %8, %9 : vector<128x200xf32>
    %cst_7 = arith.constant 0.00999999977 : f32
    %11 = vector.broadcast %cst_7 : f32 to vector<128x200xf32>
    %12 = arith.mulf %11, %8 : vector<128x200xf32>
    %13 = arith.select %10, %8, %12 : vector<128x200xi1>, vector<128x200xf32>
    %c0_8 = arith.constant 0 : index
    %c0_9 = arith.constant 0 : index
    %14 = vector.load %arg4[%c0_8, %c0_9] : memref<1x200xf32, #tpu.memory_space<vmem>>, vector<1x200xf32>
    %15 = vector.broadcast %14 : vector<1x200xf32> to vector<128x200xf32>
    %16 = arith.mulf %13, %15 : vector<128x200xf32>
    %cst_10 = arith.constant dense<0.000000e+00> : vector<128xf32>
    %17 = vector.multi_reduction <add>, %16, %cst_10 [1] : vector<128x200xf32> to vector<128xf32>
    %18 = vector.shape_cast %17 : vector<128xf32> to vector<128x1xf32>
    %c128_i32 = arith.constant 128 : i32
    %19 = arith.muli %arg0, %c128_i32 : i32
    %20 = tpu.assume_multiple %19, 128 : i32
    %21 = arith.index_cast %20 : i32 to index
    %c0_11 = arith.constant 0 : index
    %22 = vector.load %arg8[%21, %c0_11] : memref<512x1xf32, #tpu.memory_space<vmem>>, vector<128x1xf32>
    tpu.vector_store %arg8[%21, %c0_11], %18 {strides = array<i32>} : memref<512x1xf32, #tpu.memory_space<vmem>>, vector<128x1xf32>,
    %c0_12 = arith.constant 0 : index
    %c0_13 = arith.constant 0 : index
    %23 = vector.load %arg9[%c0_12, %c0_13] : memref<1x1xf32, #tpu.memory_space<vmem>>, vector<1x1xf32>
    %24 = vector.shape_cast %18 : vector<128x1xf32> to vector<1x128x1xf32>
    %cst_14 = arith.constant dense<0.000000e+00> : vector<1xf32>
    %25 = vector.multi_reduction <add>, %24, %cst_14 [1, 2] : vector<1x128x1xf32> to vector<1xf32>
    %26 = vector.shape_cast %25 : vector<1xf32> to vector<1x1x1xf32>
    %27 = vector.extract %26[0, 0, 0] : f32 from vector<1x1x1xf32>
    %28 = vector.broadcast %27 : f32 to vector<1x1xf32>
    %29 = arith.addf %23, %28 : vector<1x1xf32>
    %c0_15 = arith.constant 0 : index
    %c0_16 = arith.constant 0 : index
    %30 = vector.load %arg9[%c0_15, %c0_16] : memref<1x1xf32, #tpu.memory_space<vmem>>, vector<1x1xf32>
    tpu.vector_store %arg9[%c0_15, %c0_16], %29 {strides = array<i32>} : memref<1x1xf32, #tpu.memory_space<vmem>>, vector<1x1xf32>,
    %c0_17 = arith.constant 0 : index
    %c0_18 = arith.constant 0 : index
    %31 = vector.load %arg10[%c0_17, %c0_18] : memref<1x1xf32, #tpu.memory_space<vmem>>, vector<1x1xf32>
    %32 = arith.mulf %18, %18 : vector<128x1xf32>
    %33 = vector.shape_cast %32 : vector<128x1xf32> to vector<1x128x1xf32>
    %cst_19 = arith.constant dense<0.000000e+00> : vector<1xf32>
    %34 = vector.multi_reduction <add>, %33, %cst_19 [1, 2] : vector<1x128x1xf32> to vector<1xf32>
    %35 = vector.shape_cast %34 : vector<1xf32> to vector<1x1x1xf32>
    %36 = vector.extract %35[0, 0, 0] : f32 from vector<1x1x1xf32>
    %37 = vector.broadcast %36 : f32 to vector<1x1xf32>
    %38 = arith.addf %31, %37 : vector<1x1xf32>
    %c0_20 = arith.constant 0 : index
    %c0_21 = arith.constant 0 : index
    %39 = vector.load %arg10[%c0_20, %c0_21] : memref<1x1xf32, #tpu.memory_space<vmem>>, vector<1x1xf32>
    tpu.vector_store %arg10[%c0_20, %c0_21], %38 {strides = array<i32>} : memref<1x1xf32, #tpu.memory_space<vmem>>, vector<1x1xf32>,
    %c3_i32 = arith.constant 3 : i32
    %40 = arith.cmpi eq, %arg0, %c3_i32 : i32
    %41 = arith.extui %40 : i1 to i32
    %c0_i32_22 = arith.constant 0 : i32
    %42 = arith.cmpi ne, %41, %c0_i32_22 : i32
    scf.if %42 {
      %c0_23 = arith.constant 0 : index
      %c0_24 = arith.constant 0 : index
      %43 = vector.load %arg9[%c0_23, %c0_24] : memref<1x1xf32, #tpu.memory_space<vmem>>, vector<1x1xf32>
      %cst_25 = arith.constant 0.001953125 : f32
      %44 = vector.broadcast %cst_25 : f32 to vector<1x1xf32>
      %45 = arith.mulf %43, %44 : vector<1x1xf32>
      %c0_26 = arith.constant 0 : index
      %c0_27 = arith.constant 0 : index
      %46 = vector.load %arg10[%c0_26, %c0_27] : memref<1x1xf32, #tpu.memory_space<vmem>>, vector<1x1xf32>
      %cst_28 = arith.constant 0.001953125 : f32
      %47 = vector.broadcast %cst_28 : f32 to vector<1x1xf32>
      %48 = arith.mulf %46, %47 : vector<1x1xf32>
      %49 = arith.mulf %45, %45 : vector<1x1xf32>
      %50 = arith.subf %48, %49 : vector<1x1xf32>
      %c0_29 = arith.constant 0 : index
      %c0_30 = arith.constant 0 : index
      %51 = memref.load %arg5[%c0_29, %c0_30] : memref<1x1xf32, #tpu.memory_space<smem>>
      %c0_31 = arith.constant 0 : index
      %c0_32 = arith.constant 0 : index
      %52 = memref.load %arg6[%c0_31, %c0_32] : memref<1x1xf32, #tpu.memory_space<smem>>
      %c0_33 = arith.constant 0 : index
      %c0_34 = arith.constant 0 : index
      %53 = vector.load %arg8[%c0_33, %c0_34] : memref<512x1xf32, #tpu.memory_space<vmem>>, vector<512x1xf32>
      %54 = vector.broadcast %45 : vector<1x1xf32> to vector<512x1xf32>
      %55 = arith.subf %53, %54 : vector<512x1xf32>
      %cst_35 = arith.constant 9.99999974E-6 : f32
      %56 = vector.broadcast %cst_35 : f32 to vector<1x1xf32>
      %57 = arith.addf %50, %56 : vector<1x1xf32>
      %58 = math.rsqrt %57 : vector<1x1xf32>
      %59 = vector.broadcast %58 : vector<1x1xf32> to vector<512x1xf32>
      %60 = arith.mulf %55, %59 : vector<512x1xf32>
      %61 = vector.broadcast %51 : f32 to vector<512x1xf32>
      %62 = arith.mulf %60, %61 : vector<512x1xf32>
      %63 = vector.broadcast %52 : f32 to vector<512x1xf32>
      %64 = arith.addf %62, %63 : vector<512x1xf32>
      %cst_36 = arith.constant 0.000000e+00 : f32
      %65 = vector.broadcast %cst_36 : f32 to vector<512x1xf32>
      %66 = arith.subf %65, %64 : vector<512x1xf32>
      %67 = math.exp %66 : vector<512x1xf32>
      %cst_37 = arith.constant 1.000000e+00 : f32
      %68 = vector.broadcast %cst_37 : f32 to vector<512x1xf32>
      %69 = arith.addf %68, %67 : vector<512x1xf32>
      %cst_38 = arith.constant 1.000000e+00 : f32
      %70 = vector.broadcast %cst_38 : f32 to vector<512x1xf32>
      %71 = arith.divf %70, %69 : vector<512x1xf32>
      %c0_39 = arith.constant 0 : index
      %c0_40 = arith.constant 0 : index
      %72 = vector.load %arg7[%c0_39, %c0_40] : memref<512x1xf32, #tpu.memory_space<vmem>>, vector<512x1xf32>
      tpu.vector_store %arg7[%c0_39, %c0_40], %71 {strides = array<i32>} : memref<512x1xf32, #tpu.memory_space<vmem>>, vector<512x1xf32>,
    } else {
    }
    return
  }
  func.func @transform_0(%arg0: i32) -> (i32, i32) {
    %c0_i32 = arith.constant 0 : i32
    %c0_i32_0 = arith.constant 0 : i32
    return %arg0, %c0_i32 : i32, i32
  }
  func.func @transform_1(%arg0: i32) -> (i32, i32) {
    %c0_i32 = arith.constant 0 : i32
    %c0_i32_0 = arith.constant 0 : i32
    %c0_i32_1 = arith.constant 0 : i32
    return %c0_i32, %c0_i32_0 : i32, i32
  }
  func.func @transform_2(%arg0: i32) -> (i32, i32) {
    %c0_i32 = arith.constant 0 : i32
    %c0_i32_0 = arith.constant 0 : i32
    %c0_i32_1 = arith.constant 0 : i32
    return %c0_i32, %c0_i32_0 : i32, i32
  }
  func.func @transform_3(%arg0: i32) -> (i32, i32) {
    %c0_i32 = arith.constant 0 : i32
    %c0_i32_0 = arith.constant 0 : i32
    %c0_i32_1 = arith.constant 0 : i32
    return %c0_i32, %c0_i32_0 : i32, i32
  }
  func.func @transform_4(%arg0: i32) -> (i32, i32) {
    %c0_i32 = arith.constant 0 : i32
    %c0_i32_0 = arith.constant 0 : i32
    %c0_i32_1 = arith.constant 0 : i32
    return %c0_i32, %c0_i32_0 : i32, i32
  }
  func.func @transform_5(%arg0: i32) -> (i32, i32) {
    %c0_i32 = arith.constant 0 : i32
    %c0_i32_0 = arith.constant 0 : i32
    %c0_i32_1 = arith.constant 0 : i32
    return %c0_i32, %c0_i32_0 : i32, i32
  }
  func.func @transform_6(%arg0: i32) -> (i32, i32) {
    %c0_i32 = arith.constant 0 : i32
    %c0_i32_0 = arith.constant 0 : i32
    %c0_i32_1 = arith.constant 0 : i32
    return %c0_i32, %c0_i32_0 : i32, i32
  }
}

</mosaic_0001>

<llo_original>
// kernel: tpu_custom_call.1
$region0: #{tpu_custom_call.1}
  #allocation0 [shape = 'u32[]', space=smem, size = 0x4, offset = 0x4, fixed_abs, tag = 'smem constant byte address 0x4 - core index']
  #allocation1 [shape = 'u32[144,128]{1,0:T(1,128)}', space=vmem, size = 0x12000, scoped, tag = 'internal scratch']
  #allocation2 [shape = 'f32[512,1]{1,0:T(8,128)}', space=vmem, size = 0x40000, scoped, tag = 'scratch operand']
  #allocation3 [shape = 'f32[1,1]{1,0:T(1,128)}', space=vmem, size = 0x200, scoped, tag = 'scratch operand']
  #allocation4 [shape = 'f32[1,1]{1,0:T(1,128)}', space=vmem, size = 0x200, scoped, tag = 'scratch operand']
  #allocation5 [shape = 'f32[1,1]{1,0:T(1,128)S(6)}', space=smem, size = 0x200, scoped, tag = 'scoped memory for tpu_custom_call.1']
  #allocation6 [shape = 'f32[1,1]{1,0:T(1,128)S(6)}', space=smem, size = 0x200, scoped, tag = 'scoped memory for tpu_custom_call.1']
  %s0 = inlined_call_operand.vmem [shape: bf16[512,784], index: 0, kind: input, shape index: {}]
  %s1 = inlined_call_operand.vmem [shape: bf16[784,200], index: 1, kind: input, shape index: {}]
  %s2 = inlined_call_operand.vmem [shape: f32[1,200], index: 2, kind: input, shape index: {}]
  %s3 = inlined_call_operand.vmem [shape: f32[1,200], index: 3, kind: input, shape index: {}]
  %s4 = inlined_call_operand.<no memory space> [shape: f32[1,1], index: 4, kind: input, shape index: {}]
  %s5 = inlined_call_operand.<no memory space> [shape: f32[1,1], index: 5, kind: input, shape index: {}]
  %s6 = inlined_call_operand.vmem [shape: f32[512,1], index: 6, kind: output, shape index: {}]
  %s7 = sld [smem:[#allocation0]]
  $region65: #{tpu_custom_call.1} parent=0
    _
  %s9 = ssub.s32 1, %s7
  %s10 = scalar_select 0, %s9, %s7
  %11 = sst [smem:[#allocation5]] %s4
  %12 = sst [smem:[#allocation6]] %s5
  loop: start=0, step=1, limit=6
  $region2: #{tpu_custom_call.1} parent=0 // loop_pre_header
    _
  $region3: #{tpu_custom_call.1} parent=0 // loop_header
    %s14 = sphi 0, %s18
    %p15 = scmp.ge.s32.totalorder %s14, 6
    %s24 = sphi 0, %s26
    %s27 = sphi 0, %s24
    %s28 = sphi 0, %s27
    %s44 = sphi 0, %s28
    %s48 = sphi 0, %s48
    %s50 = sphi 0, %s48
    %s51 = sphi 0, %s50
    %s65 = sphi 0, %s51
    %s69 = sphi 0, %s69
    %s71 = sphi 0, %s69
    %s72 = sphi 0, %s71
    %s86 = sphi 0, %s72
    %s90 = sphi 0, %s90
    %s92 = sphi 0, %s90
    %s93 = sphi 0, %s92
    %s107 = sphi 0, %s93
    %s111 = sphi 0, %s111
    %s113 = sphi 0, %s111
    %s114 = sphi 0, %s113
    %s128 = sphi 0, %s114
    %s132 = sphi 0, %s132
    %s134 = sphi 0, %s132
    %s135 = sphi 0, %s134
    %s149 = sphi 0, %s135
    %s153 = sphi 0, %s153
    %s155 = sphi 0, %s153
    %s156 = sphi 0, %s155
    %s170 = sphi 0, %s156
  $region4: #{tpu_custom_call.1} parent=0 // loop_header_branch
    %17 = sbr.rel (%p15) target = $region8
  $region5: #{tpu_custom_call.1} parent=0 // loop_body
    %s19 = ssub.s32 %s14, 1
    %s20 = ssub.s32 %s14, 2
    %s21 = sadd.s32 %s14, 1
    %s22 = ssub.s32 %s14, %s21
    %p23 = scmp.eq.s32.totalorder %s22, 0
    %s25 = sadd.s32 %s24, 1
    %s26 = scalar_select %p23, %s24, %s25
    %p29 = pneg %p23
    %p30 = scmp.eq.s32.totalorder %s14, 3
    %p31 = por %p29, %p30
    %p32 = scmp.ne.s32.totalorder %s24, %s27
    %p33 = scmp.eq.s32.totalorder %s14, 0
    %p34 = por %p32, %p33
    %p35 = scmp.ne.s32.totalorder %s24, %s27
    %p36 = scmp.eq.s32.totalorder %s19, 3
    %p37 = por %p35, %p36
    %p38 = scmp.ne.s32.totalorder %s27, %s28
    %p39 = scmp.eq.s32.totalorder %s19, 0
    %p40 = por %p38, %p39
    %p41 = scmp.ne.s32.totalorder %s27, %s28
    %p42 = scmp.eq.s32.totalorder %s20, 3
    %p43 = por %p41, %p42
    %p45 = scmp.ne.s32.totalorder %s28, %s44
    %p46 = scmp.eq.s32.totalorder %s20, 0
    %p47 = por %p45, %p46
    %s49 = sadd.s32 %s48, 1
    %p52 = scmp.eq.s32.totalorder %s14, 3
    %p53 = scmp.ne.s32.totalorder %s48, %s50
    %p54 = scmp.eq.s32.totalorder %s14, 0
    %p55 = por %p53, %p54
    %p56 = scmp.ne.s32.totalorder %s48, %s50
    %p57 = scmp.eq.s32.totalorder %s19, 3
    %p58 = por %p56, %p57
    %p59 = scmp.ne.s32.totalorder %s50, %s51
    %p60 = scmp.eq.s32.totalorder %s19, 0
    %p61 = por %p59, %p60
    %p62 = scmp.ne.s32.totalorder %s50, %s51
    %p63 = scmp.eq.s32.totalorder %s20, 3
    %p64 = por %p62, %p63
    %p66 = scmp.ne.s32.totalorder %s51, %s65
    %p67 = scmp.eq.s32.totalorder %s20, 0
    %p68 = por %p66, %p67
    %s70 = sadd.s32 %s69, 1
    %p73 = scmp.eq.s32.totalorder %s14, 3
    %p74 = scmp.ne.s32.totalorder %s69, %s71
    %p75 = scmp.eq.s32.totalorder %s14, 0
    %p76 = por %p74, %p75
    %p77 = scmp.ne.s32.totalorder %s69, %s71
    %p78 = scmp.eq.s32.totalorder %s19, 3
    %p79 = por %p77, %p78
    %p80 = scmp.ne.s32.totalorder %s71, %s72
    %p81 = scmp.eq.s32.totalorder %s19, 0
    %p82 = por %p80, %p81
    %p83 = scmp.ne.s32.totalorder %s71, %s72
    %p84 = scmp.eq.s32.totalorder %s20, 3
    %p85 = por %p83, %p84
    %p87 = scmp.ne.s32.totalorder %s72, %s86
    %p88 = scmp.eq.s32.totalorder %s20, 0
    %p89 = por %p87, %p88
    %s91 = sadd.s32 %s90, 1
    %p94 = scmp.eq.s32.totalorder %s14, 3
    %p95 = scmp.ne.s32.totalorder %s90, %s92
    %p96 = scmp.eq.s32.totalorder %s14, 0
    %p97 = por %p95, %p96
    %p98 = scmp.ne.s32.totalorder %s90, %s92
    %p99 = scmp.eq.s32.totalorder %s19, 3
    %p100 = por %p98, %p99
    %p101 = scmp.ne.s32.totalorder %s92, %s93
    %p102 = scmp.eq.s32.totalorder %s19, 0
    %p103 = por %p101, %p102
    %p104 = scmp.ne.s32.totalorder %s92, %s93
    %p105 = scmp.eq.s32.totalorder %s20, 3
    %p106 = por %p104, %p105
    %p108 = scmp.ne.s32.totalorder %s93, %s107
    %p109 = scmp.eq.s32.totalorder %s20, 0
    %p110 = por %p108, %p109
    %s112 = sadd.s32 %s111, 1
    %p115 = scmp.eq.s32.totalorder %s14, 3
    %p116 = scmp.ne.s32.totalorder %s111, %s113
    %p117 = scmp.eq.s32.totalorder %s14, 0
    %p118 = por %p116, %p117
    %p119 = scmp.ne.s32.totalorder %s111, %s113
    %p120 = scmp.eq.s32.totalorder %s19, 3
    %p121 = por %p119, %p120
    %p122 = scmp.ne.s32.totalorder %s113, %s114
    %p123 = scmp.eq.s32.totalorder %s19, 0
    %p124 = por %p122, %p123
    %p125 = scmp.ne.s32.totalorder %s113, %s114
    %p126 = scmp.eq.s32.totalorder %s20, 3
    %p127 = por %p125, %p126
    %p129 = scmp.ne.s32.totalorder %s114, %s128
    %p130 = scmp.eq.s32.totalorder %s20, 0
    %p131 = por %p129, %p130
    %s133 = sadd.s32 %s132, 1
    %p136 = scmp.eq.s32.totalorder %s14, 3
    %p137 = scmp.ne.s32.totalorder %s132, %s134
    %p138 = scmp.eq.s32.totalorder %s14, 0
    %p139 = por %p137, %p138
    %p140 = scmp.ne.s32.totalorder %s132, %s134
    %p141 = scmp.eq.s32.totalorder %s19, 3
    %p142 = por %p140, %p141
    %p143 = scmp.ne.s32.totalorder %s134, %s135
    %p144 = scmp.eq.s32.totalorder %s19, 0
    %p145 = por %p143, %p144
    %p146 = scmp.ne.s32.totalorder %s134, %s135
    %p147 = scmp.eq.s32.totalorder %s20, 3
    %p148 = por %p146, %p147
    %p150 = scmp.ne.s32.totalorder %s135, %s149
    %p151 = scmp.eq.s32.totalorder %s20, 0
    %p152 = por %p150, %p151
    %s154 = sadd.s32 %s153, 1
    %p157 = scmp.eq.s32.totalorder %s14, 3
    %p158 = scmp.ne.s32.totalorder %s153, %s155
    %p159 = scmp.eq.s32.totalorder %s14, 0
    %p160 = por %p158, %p159
    %p161 = scmp.ne.s32.totalorder %s153, %s155
    %p162 = scmp.eq.s32.totalorder %s19, 3
    %p163 = por %p161, %p162
    %p164 = scmp.ne.s32.totalorder %s155, %s156
    %p165 = scmp.eq.s32.totalorder %s19, 0
    %p166 = por %p164, %p165
    %p167 = scmp.ne.s32.totalorder %s155, %s156
    %p168 = scmp.eq.s32.totalorder %s20, 3
    %p169 = por %p167, %p168
    %p171 = scmp.ne.s32.totalorder %s156, %s170
    %p172 = scmp.eq.s32.totalorder %s20, 0
    %p173 = por %p171, %p172
    %p174 = scmp.le.s32.totalorder 1, %s14
    %p175 = scmp.lt.s32.totalorder %s14, 5
    %p176 = pnand %p174, %p175
    %p177 = pneg %p176
    // Predicated region
    $region9: #{tpu_custom_call.1} parent=5 // pred_check
      _
    $region10: #{tpu_custom_call.1} parent=5 // pred_check_branch
      %179 = sbr.rel (%p176) target = $region12
    $region11: #{tpu_custom_call.1} parent=5 // pred_region
      %s180 = ssub.s32 %s14, 1
      // Predicated region
      $region13: #{tpu_custom_call.1} parent=11 // pred_check
        %p181 = pneg %p61
      $region14: #{tpu_custom_call.1} parent=11 // pred_check_branch
        %183 = sbr.rel (%p181) target = $region16
      $region15: #{tpu_custom_call.1} parent=11 // pred_region
        _
      $region16: #{tpu_custom_call.1} parent=11 // pred_fallthru
        _
      // Predicated region
      $region17: #{tpu_custom_call.1} parent=11 // pred_check
        %p184 = pneg %p82
      $region18: #{tpu_custom_call.1} parent=11 // pred_check_branch
        %186 = sbr.rel (%p184) target = $region20
      $region19: #{tpu_custom_call.1} parent=11 // pred_region
        _
      $region20: #{tpu_custom_call.1} parent=11 // pred_fallthru
        _
      // Predicated region
      $region21: #{tpu_custom_call.1} parent=11 // pred_check
        %p187 = pneg %p103
      $region22: #{tpu_custom_call.1} parent=11 // pred_check_branch
        %189 = sbr.rel (%p187) target = $region24
      $region23: #{tpu_custom_call.1} parent=11 // pred_region
        _
      $region24: #{tpu_custom_call.1} parent=11 // pred_fallthru
        _
      // Predicated region
      $region25: #{tpu_custom_call.1} parent=11 // pred_check
        %p190 = pneg %p124
      $region26: #{tpu_custom_call.1} parent=11 // pred_check_branch
        %192 = sbr.rel (%p190) target = $region28
      $region27: #{tpu_custom_call.1} parent=11 // pred_region
        _
      $region28: #{tpu_custom_call.1} parent=11 // pred_fallthru
        _
      // Predicated region
      $region29: #{tpu_custom_call.1} parent=11 // pred_check
        %p193 = pneg %p145
      $region30: #{tpu_custom_call.1} parent=11 // pred_check_branch
        %195 = sbr.rel (%p193) target = $region32
      $region31: #{tpu_custom_call.1} parent=11 // pred_region
        _
      $region32: #{tpu_custom_call.1} parent=11 // pred_fallthru
        _
    $region12: #{tpu_custom_call.1} parent=5 // pred_fallthru
      _
    %p196 = scmp.lt.s32.totalorder %s14, 4
    // Predicated region
    $region33: #{tpu_custom_call.1} parent=5 // pred_check
      %p197 = pneg %p196
    $region34: #{tpu_custom_call.1} parent=5 // pred_check_branch
      %199 = sbr.rel (%p197) target = $region36
    $region35: #{tpu_custom_call.1} parent=5 // pred_region
      // Predicated region
      $region37: #{tpu_custom_call.1} parent=35 // pred_check
        %p200 = pneg %p34
      $region38: #{tpu_custom_call.1} parent=35 // pred_check_branch
        %202 = sbr.rel (%p200) target = $region40
      $region39: #{tpu_custom_call.1} parent=35 // pred_region
        %s203 = smul.u32 16, %s14
        %p204 = scmp.lt.s32.totalorder %s203, 63
        %s205 = scalar_select %p204, %s203, 63
        %s206 = smul.addr %s205, 7
        %s207 = smul.addr %s206, 4
        %s208 = scalar_lea.vmem %s0, %s207
        %s209 = smul.u32 16, %s14
      $region40: #{tpu_custom_call.1} parent=35 // pred_fallthru
        _
    $region36: #{tpu_custom_call.1} parent=5 // pred_fallthru
      _
    %p210 = scmp.le.s32.totalorder 1, %s14
    %p211 = scmp.lt.s32.totalorder %s14, 5
    %p212 = pnand %p210, %p211
    %p213 = pneg %p212
    // Predicated region
    $region41: #{tpu_custom_call.1} parent=5 // pred_check
      _
    $region42: #{tpu_custom_call.1} parent=5 // pred_check_branch
      %215 = sbr.rel (%p212) target = $region44
    $region43: #{tpu_custom_call.1} parent=5 // pred_region
      %s216 = ssub.s32 %s14, 1
      %s217 = smul.u32 16, %s19
      %p218 = scmp.lt.s32.totalorder %s217, 63
      %s219 = scalar_select %p218, %s217, 63
      %s220 = smul.addr %s219, 7
      %s221 = smul.addr %s220, 4
      %s222 = scalar_lea.vmem %s0, %s221
      %p223 = pneg %p40
      %p224 = pneg %p37
      %p225 = pneg %p61
      %p226 = pneg %p58
      %p227 = pneg %p82
      %p228 = pneg %p79
      %p229 = pneg %p103
      %p230 = pneg %p100
      %p231 = pneg %p124
      %p232 = pneg %p121
      %p233 = pneg %p145
      %p234 = pneg %p142
      %p235 = pneg %p166
      %p236 = pneg %p163
      %s237 = smul.u32 16, %s19
      %p238 = scmp.lt.s32.totalorder %s237, 63
      %s239 = scalar_select %p238, %s237, 63
      %s240 = smul.addr %s239, 7
      %s241 = smul.addr %s240, 4
      %s242 = scalar_lea.vmem %s0, %s241
      %s243 = smul.u32 16, %s19
      %p245 = scmp.eq.s32.totalorder %s19, 0
      // Predicated region
      $region45: #{tpu_custom_call.1} parent=43 // pred_check
        %p246 = pneg %p245
      $region46: #{tpu_custom_call.1} parent=43 // pred_check_branch
        %248 = sbr.rel (%p246) target = $region48
      $region47: #{tpu_custom_call.1} parent=43 // pred_region
        %vm249 = vcmask 0
        %250 = vst.msk [vmem:[#allocation3] sm:$0x1] %vm249, 0.0
        %251 = vst.msk [vmem:[#allocation4] sm:$0x1] %vm249, 0.0
      $region48: #{tpu_custom_call.1} parent=43 // pred_fallthru
        _
      %v252 = vld [vmem:[%s242] sm:$0xff]
      %v253 = vld [vmem:[%s242 + $0x8] sm:$0xff]
      %v254 = vld [vmem:[%s242 + $0x10] sm:$0xff]
      %v255 = vld [vmem:[%s242 + $0x18] sm:$0xf]
      %v256 = vld [vmem:[%s242 + $0x1c] sm:$0xff]
      %v257 = vld [vmem:[%s242 + $0x24] sm:$0xff]
      %v258 = vld [vmem:[%s242 + $0x2c] sm:$0xff]
      %v259 = vld [vmem:[%s242 + $0x34] sm:$0xf]
      %v260 = vld [vmem:[%s242 + $0x38] sm:$0xff]
      %v261 = vld [vmem:[%s242 + $0x40] sm:$0xff]
      %v262 = vld [vmem:[%s242 + $0x48] sm:$0xff]
      %v263 = vld [vmem:[%s242 + $0x50] sm:$0xf]
      %v264 = vld [vmem:[%s242 + $0x54] sm:$0xff]
      %v265 = vld [vmem:[%s242 + $0x5c] sm:$0xff]
      %v266 = vld [vmem:[%s242 + $0x64] sm:$0xff]
      %v267 = vld [vmem:[%s242 + $0x6c] sm:$0xf]
      %v268 = vld [vmem:[%s242 + $0x70] sm:$0xff]
      %v269 = vld [vmem:[%s242 + $0x78] sm:$0xff]
      %v270 = vld [vmem:[%s242 + $0x80] sm:$0xff]
      %v271 = vld [vmem:[%s242 + $0x88] sm:$0xf]
      %v272 = vld [vmem:[%s242 + $0x8c] sm:$0xff]
      %v273 = vld [vmem:[%s242 + $0x94] sm:$0xff]
      %v274 = vld [vmem:[%s242 + $0x9c] sm:$0xff]
      %v275 = vld [vmem:[%s242 + $0xa4] sm:$0xf]
      %v276 = vld [vmem:[%s242 + $0xa8] sm:$0xff]
      %v277 = vld [vmem:[%s242 + $0xb0] sm:$0xff]
      %v278 = vld [vmem:[%s242 + $0xb8] sm:$0xff]
      %v279 = vld [vmem:[%s242 + $0xc0] sm:$0xf]
      %v280 = vld [vmem:[%s242 + $0xc4] sm:$0xff]
      %v281 = vld [vmem:[%s242 + $0xcc] sm:$0xff]
      %v282 = vld [vmem:[%s242 + $0xd4] sm:$0xff]
      %v283 = vld [vmem:[%s242 + $0xdc] sm:$0xf]
      %v284 = vld [vmem:[%s242 + $0xe0] sm:$0xff]
      %v285 = vld [vmem:[%s242 + $0xe8] sm:$0xff]
      %v286 = vld [vmem:[%s242 + $0xf0] sm:$0xff]
      %v287 = vld [vmem:[%s242 + $0xf8] sm:$0xf]
      %v288 = vld [vmem:[%s242 + $0xfc] sm:$0xff]
      %v289 = vld [vmem:[%s242 + $0x104] sm:$0xff]
      %v290 = vld [vmem:[%s242 + $0x10c] sm:$0xff]
      %v291 = vld [vmem:[%s242 + $0x114] sm:$0xf]
      %v292 = vld [vmem:[%s242 + $0x118] sm:$0xff]
      %v293 = vld [vmem:[%s242 + $0x120] sm:$0xff]
      %v294 = vld [vmem:[%s242 + $0x128] sm:$0xff]
      %v295 = vld [vmem:[%s242 + $0x130] sm:$0xf]
      %v296 = vld [vmem:[%s242 + $0x134] sm:$0xff]
      %v297 = vld [vmem:[%s242 + $0x13c] sm:$0xff]
      %v298 = vld [vmem:[%s242 + $0x144] sm:$0xff]
      %v299 = vld [vmem:[%s242 + $0x14c] sm:$0xf]
      %v300 = vld [vmem:[%s242 + $0x150] sm:$0xff]
      %v301 = vld [vmem:[%s242 + $0x158] sm:$0xff]
      %v302 = vld [vmem:[%s242 + $0x160] sm:$0xff]
      %v303 = vld [vmem:[%s242 + $0x168] sm:$0xf]
      %v304 = vld [vmem:[%s242 + $0x16c] sm:$0xff]
      %v305 = vld [vmem:[%s242 + $0x174] sm:$0xff]
      %v306 = vld [vmem:[%s242 + $0x17c] sm:$0xff]
      %v307 = vld [vmem:[%s242 + $0x184] sm:$0xf]
      %v308 = vld [vmem:[%s242 + $0x188] sm:$0xff]
      %v309 = vld [vmem:[%s242 + $0x190] sm:$0xff]
      %v310 = vld [vmem:[%s242 + $0x198] sm:$0xff]
      %v311 = vld [vmem:[%s242 + $0x1a0] sm:$0xf]
      %v312 = vld [vmem:[%s242 + $0x1a4] sm:$0xff]
      %v313 = vld [vmem:[%s242 + $0x1ac] sm:$0xff]
      %v314 = vld [vmem:[%s242 + $0x1b4] sm:$0xff]
      %v315 = vld [vmem:[%s242 + $0x1bc] sm:$0xf]
      %v316 = vld [vmem:[%s1] sm:$0xff]
      %v317 = vld [vmem:[%s1 + $0x8] sm:$0xff]
      %v318 = vld [vmem:[%s1 + $0x10] sm:$0xff]
      %v319 = vld [vmem:[%s1 + $0x18] sm:$0xff]
      %v320 = vld [vmem:[%s1 + $0x20] sm:$0xff]
      %v321 = vld [vmem:[%s1 + $0x28] sm:$0xff]
      %v322 = vld [vmem:[%s1 + $0x30] sm:$0xff]
      %v323 = vld [vmem:[%s1 + $0x38] sm:$0xff]
      %v324 = vld [vmem:[%s1 + $0x40] sm:$0xff]
      %v325 = vld [vmem:[%s1 + $0x48] sm:$0xff]
      %v326 = vld [vmem:[%s1 + $0x50] sm:$0xff]
      %v327 = vld [vmem:[%s1 + $0x58] sm:$0xff]
      %v328 = vld [vmem:[%s1 + $0x60] sm:$0xff]
      %v329 = vld [vmem:[%s1 + $0x68] sm:$0xff]
      %v330 = vld [vmem:[%s1 + $0x70] sm:$0xff]
      %v331 = vld [vmem:[%s1 + $0x78] sm:$0xff]
      %v332 = vld [vmem:[%s1 + $0x80] sm:$0xff]
      %v333 = vld [vmem:[%s1 + $0x88] sm:$0xff]
      %v334 = vld [vmem:[%s1 + $0x90] sm:$0xff]
      %v335 = vld [vmem:[%s1 + $0x98] sm:$0xff]
      %v336 = vld [vmem:[%s1 + $0xa0] sm:$0xff]
      %v337 = vld [vmem:[%s1 + $0xa8] sm:$0xff]
      %v338 = vld [vmem:[%s1 + $0xb0] sm:$0xff]
      %v339 = vld [vmem:[%s1 + $0xb8] sm:$0xff]
      %v340 = vld [vmem:[%s1 + $0xc0] sm:$0xff]
      %v341 = vld [vmem:[%s1 + $0xc8] sm:$0xff]
      %v342 = vld [vmem:[%s1 + $0xd0] sm:$0xff]
      %v343 = vld [vmem:[%s1 + $0xd8] sm:$0xff]
      %v344 = vld [vmem:[%s1 + $0xe0] sm:$0xff]
      %v345 = vld [vmem:[%s1 + $0xe8] sm:$0xff]
      %v346 = vld [vmem:[%s1 + $0xf0] sm:$0xff]
      %v347 = vld [vmem:[%s1 + $0xf8] sm:$0xff]
      %v348 = vld [vmem:[%s1 + $0x100] sm:$0xff]
      %v349 = vld [vmem:[%s1 + $0x108] sm:$0xff]
      %v350 = vld [vmem:[%s1 + $0x110] sm:$0xff]
      %v351 = vld [vmem:[%s1 + $0x118] sm:$0xff]
      %v352 = vld [vmem:[%s1 + $0x120] sm:$0xff]
      %v353 = vld [vmem:[%s1 + $0x128] sm:$0xff]
      %v354 = vld [vmem:[%s1 + $0x130] sm:$0xff]
      %v355 = vld [vmem:[%s1 + $0x138] sm:$0xff]
      %v356 = vld [vmem:[%s1 + $0x140] sm:$0xff]
      %v357 = vld [vmem:[%s1 + $0x148] sm:$0xff]
      %v358 = vld [vmem:[%s1 + $0x150] sm:$0xff]
      %v359 = vld [vmem:[%s1 + $0x158] sm:$0xff]
      %v360 = vld [vmem:[%s1 + $0x160] sm:$0xff]
      %v361 = vld [vmem:[%s1 + $0x168] sm:$0xff]
      %v362 = vld [vmem:[%s1 + $0x170] sm:$0xff]
      %v363 = vld [vmem:[%s1 + $0x178] sm:$0xff]
      %v364 = vld [vmem:[%s1 + $0x180] sm:$0xff]
      %v365 = vld [vmem:[%s1 + $0x188] sm:$0xff]
      %v366 = vld [vmem:[%s1 + $0x190] sm:$0xff]
      %v367 = vld [vmem:[%s1 + $0x198] sm:$0xff]
      %v368 = vld [vmem:[%s1 + $0x1a0] sm:$0xff]
      %v369 = vld [vmem:[%s1 + $0x1a8] sm:$0xff]
      %v370 = vld [vmem:[%s1 + $0x1b0] sm:$0xff]
      %v371 = vld [vmem:[%s1 + $0x1b8] sm:$0xff]
      %v372 = vld [vmem:[%s1 + $0x1c0] sm:$0xff]
      %v373 = vld [vmem:[%s1 + $0x1c8] sm:$0xff]
      %v374 = vld [vmem:[%s1 + $0x1d0] sm:$0xff]
      %v375 = vld [vmem:[%s1 + $0x1d8] sm:$0xff]
      %v376 = vld [vmem:[%s1 + $0x1e0] sm:$0xff]
      %v377 = vld [vmem:[%s1 + $0x1e8] sm:$0xff]
      %v378 = vld [vmem:[%s1 + $0x1f0] sm:$0xff]
      %v379 = vld [vmem:[%s1 + $0x1f8] sm:$0xff]
      %v380 = vld [vmem:[%s1 + $0x200] sm:$0xff]
      %v381 = vld [vmem:[%s1 + $0x208] sm:$0xff]
      %v382 = vld [vmem:[%s1 + $0x210] sm:$0xff]
      %v383 = vld [vmem:[%s1 + $0x218] sm:$0xff]
      %v384 = vld [vmem:[%s1 + $0x220] sm:$0xff]
      %v385 = vld [vmem:[%s1 + $0x228] sm:$0xff]
      %v386 = vld [vmem:[%s1 + $0x230] sm:$0xff]
      %v387 = vld [vmem:[%s1 + $0x238] sm:$0xff]
      %v388 = vld [vmem:[%s1 + $0x240] sm:$0xff]
      %v389 = vld [vmem:[%s1 + $0x248] sm:$0xff]
      %v390 = vld [vmem:[%s1 + $0x250] sm:$0xff]
      %v391 = vld [vmem:[%s1 + $0x258] sm:$0xff]
      %v392 = vld [vmem:[%s1 + $0x260] sm:$0xff]
      %v393 = vld [vmem:[%s1 + $0x268] sm:$0xff]
      %v394 = vld [vmem:[%s1 + $0x270] sm:$0xff]
      %v395 = vld [vmem:[%s1 + $0x278] sm:$0xff]
      %v396 = vld [vmem:[%s1 + $0x280] sm:$0xff]
      %v397 = vld [vmem:[%s1 + $0x288] sm:$0xff]
      %v398 = vld [vmem:[%s1 + $0x290] sm:$0xff]
      %v399 = vld [vmem:[%s1 + $0x298] sm:$0xff]
      %v400 = vld [vmem:[%s1 + $0x2a0] sm:$0xff]
      %v401 = vld [vmem:[%s1 + $0x2a8] sm:$0xff]
      %v402 = vld [vmem:[%s1 + $0x2b0] sm:$0xff]
      %v403 = vld [vmem:[%s1 + $0x2b8] sm:$0xff]
      %v404 = vld [vmem:[%s1 + $0x2c0] sm:$0xff]
      %v405 = vld [vmem:[%s1 + $0x2c8] sm:$0xff]
      %v406 = vld [vmem:[%s1 + $0x2d0] sm:$0xff]
      %v407 = vld [vmem:[%s1 + $0x2d8] sm:$0xff]
      %v408 = vld [vmem:[%s1 + $0x2e0] sm:$0xff]
      %v409 = vld [vmem:[%s1 + $0x2e8] sm:$0xff]
      %v410 = vld [vmem:[%s1 + $0x2f0] sm:$0xff]
      %v411 = vld [vmem:[%s1 + $0x2f8] sm:$0xff]
      %v412 = vld [vmem:[%s1 + $0x300] sm:$0xff]
      %v413 = vld [vmem:[%s1 + $0x308] sm:$0xff]
      %v414 = vld [vmem:[%s2] sm:$0x3]
      %v416 = vlaneseq
      %v417 = vshrl.u32 %v416, 7
      %v418 = vsub.s32 0, %v417
      %v419 = vrot.slane %v414, %v418
      %v420 = vlaneseq
      %v421 = vshrl.u32 %v420, 7
      %v422 = vsub.s32 1, %v421
      %v423 = vrot.slane %v414, %v422
      %v490 = vunpack.c.l.b16 %v252
      %v491 = vunpack.c.h.b16 %v252
      %v492 = vunpack.c.l.b16 %v253
      %v493 = vunpack.c.h.b16 %v253
      %v494 = vunpack.c.l.b16 %v254
      %v495 = vunpack.c.h.b16 %v254
      %v496 = vunpack.c.l.b16 %v255
      %v497 = vunpack.c.l.b16 %v256
      %v498 = vunpack.c.h.b16 %v256
      %v499 = vunpack.c.l.b16 %v257
      %v500 = vunpack.c.h.b16 %v257
      %v501 = vunpack.c.l.b16 %v258
      %v502 = vunpack.c.h.b16 %v258
      %v503 = vunpack.c.l.b16 %v259
      %v504 = vunpack.c.l.b16 %v260
      %v505 = vunpack.c.h.b16 %v260
      %v506 = vunpack.c.l.b16 %v261
      %v507 = vunpack.c.h.b16 %v261
      %v508 = vunpack.c.l.b16 %v262
      %v509 = vunpack.c.h.b16 %v262
      %v510 = vunpack.c.l.b16 %v263
      %v511 = vunpack.c.l.b16 %v264
      %v512 = vunpack.c.h.b16 %v264
      %v513 = vunpack.c.l.b16 %v265
      %v514 = vunpack.c.h.b16 %v265
      %v515 = vunpack.c.l.b16 %v266
      %v516 = vunpack.c.h.b16 %v266
      %v517 = vunpack.c.l.b16 %v267
      %v518 = vunpack.c.l.b16 %v268
      %v519 = vunpack.c.h.b16 %v268
      %v520 = vunpack.c.l.b16 %v269
      %v521 = vunpack.c.h.b16 %v269
      %v522 = vunpack.c.l.b16 %v270
      %v523 = vunpack.c.h.b16 %v270
      %v524 = vunpack.c.l.b16 %v271
      %v525 = vunpack.c.l.b16 %v272
      %v526 = vunpack.c.h.b16 %v272
      %v527 = vunpack.c.l.b16 %v273
      %v528 = vunpack.c.h.b16 %v273
      %v529 = vunpack.c.l.b16 %v274
      %v530 = vunpack.c.h.b16 %v274
      %v531 = vunpack.c.l.b16 %v275
      %v532 = vunpack.c.l.b16 %v276
      %v533 = vunpack.c.h.b16 %v276
      %v534 = vunpack.c.l.b16 %v277
      %v535 = vunpack.c.h.b16 %v277
      %v536 = vunpack.c.l.b16 %v278
      %v537 = vunpack.c.h.b16 %v278
      %v538 = vunpack.c.l.b16 %v279
      %v539 = vunpack.c.l.b16 %v280
      %v540 = vunpack.c.h.b16 %v280
      %v541 = vunpack.c.l.b16 %v281
      %v542 = vunpack.c.h.b16 %v281
      %v543 = vunpack.c.l.b16 %v282
      %v544 = vunpack.c.h.b16 %v282
      %v545 = vunpack.c.l.b16 %v283
      %v546 = vunpack.c.l.b16 %v284
      %v547 = vunpack.c.h.b16 %v284
      %v548 = vunpack.c.l.b16 %v285
      %v549 = vunpack.c.h.b16 %v285
      %v550 = vunpack.c.l.b16 %v286
      %v551 = vunpack.c.h.b16 %v286
      %v552 = vunpack.c.l.b16 %v287
      %v553 = vunpack.c.l.b16 %v288
      %v554 = vunpack.c.h.b16 %v288
      %v555 = vunpack.c.l.b16 %v289
      %v556 = vunpack.c.h.b16 %v289
      %v557 = vunpack.c.l.b16 %v290
      %v558 = vunpack.c.h.b16 %v290
      %v559 = vunpack.c.l.b16 %v291
      %v560 = vunpack.c.l.b16 %v292
      %v561 = vunpack.c.h.b16 %v292
      %v562 = vunpack.c.l.b16 %v293
      %v563 = vunpack.c.h.b16 %v293
      %v564 = vunpack.c.l.b16 %v294
      %v565 = vunpack.c.h.b16 %v294
      %v566 = vunpack.c.l.b16 %v295
      %v567 = vunpack.c.l.b16 %v296
      %v568 = vunpack.c.h.b16 %v296
      %v569 = vunpack.c.l.b16 %v297
      %v570 = vunpack.c.h.b16 %v297
      %v571 = vunpack.c.l.b16 %v298
      %v572 = vunpack.c.h.b16 %v298
      %v573 = vunpack.c.l.b16 %v299
      %v574 = vunpack.c.l.b16 %v300
      %v575 = vunpack.c.h.b16 %v300
      %v576 = vunpack.c.l.b16 %v301
      %v577 = vunpack.c.h.b16 %v301
      %v578 = vunpack.c.l.b16 %v302
      %v579 = vunpack.c.h.b16 %v302
      %v580 = vunpack.c.l.b16 %v303
      %v581 = vunpack.c.l.b16 %v304
      %v582 = vunpack.c.h.b16 %v304
      %v583 = vunpack.c.l.b16 %v305
      %v584 = vunpack.c.h.b16 %v305
      %v585 = vunpack.c.l.b16 %v306
      %v586 = vunpack.c.h.b16 %v306
      %v587 = vunpack.c.l.b16 %v307
      %v588 = vunpack.c.l.b16 %v308
      %v589 = vunpack.c.h.b16 %v308
      %v590 = vunpack.c.l.b16 %v309
      %v591 = vunpack.c.h.b16 %v309
      %v592 = vunpack.c.l.b16 %v310
      %v593 = vunpack.c.h.b16 %v310
      %v594 = vunpack.c.l.b16 %v311
      %v595 = vunpack.c.l.b16 %v312
      %v596 = vunpack.c.h.b16 %v312
      %v597 = vunpack.c.l.b16 %v313
      %v598 = vunpack.c.h.b16 %v313
      %v599 = vunpack.c.l.b16 %v314
      %v600 = vunpack.c.h.b16 %v314
      %v601 = vunpack.c.l.b16 %v315
      %v602 = vpack.c.b16 %v497, %v490
      %v603 = vpack.c.b16 %v498, %v491
      %v604 = vpack.c.b16 %v499, %v492
      %v605 = vpack.c.b16 %v500, %v493
      %v606 = vpack.c.b16 %v501, %v494
      %v607 = vpack.c.b16 %v502, %v495
      %v608 = vpack.c.b16 %v503, %v496
      %v609 = vpack.c.b16 %v511, %v504
      %v610 = vpack.c.b16 %v512, %v505
      %v611 = vpack.c.b16 %v513, %v506
      %v612 = vpack.c.b16 %v514, %v507
      %v613 = vpack.c.b16 %v515, %v508
      %v614 = vpack.c.b16 %v516, %v509
      %v615 = vpack.c.b16 %v517, %v510
      %v616 = vpack.c.b16 %v525, %v518
      %v617 = vpack.c.b16 %v526, %v519
      %v618 = vpack.c.b16 %v527, %v520
      %v619 = vpack.c.b16 %v528, %v521
      %v620 = vpack.c.b16 %v529, %v522
      %v621 = vpack.c.b16 %v530, %v523
      %v622 = vpack.c.b16 %v531, %v524
      %v623 = vpack.c.b16 %v539, %v532
      %v624 = vpack.c.b16 %v540, %v533
      %v625 = vpack.c.b16 %v541, %v534
      %v626 = vpack.c.b16 %v542, %v535
      %v627 = vpack.c.b16 %v543, %v536
      %v628 = vpack.c.b16 %v544, %v537
      %v629 = vpack.c.b16 %v545, %v538
      %v630 = vpack.c.b16 %v553, %v546
      %v631 = vpack.c.b16 %v554, %v547
      %v632 = vpack.c.b16 %v555, %v548
      %v633 = vpack.c.b16 %v556, %v549
      %v634 = vpack.c.b16 %v557, %v550
      %v635 = vpack.c.b16 %v558, %v551
      %v636 = vpack.c.b16 %v559, %v552
      %v637 = vpack.c.b16 %v567, %v560
      %v638 = vpack.c.b16 %v568, %v561
      %v639 = vpack.c.b16 %v569, %v562
      %v640 = vpack.c.b16 %v570, %v563
      %v641 = vpack.c.b16 %v571, %v564
      %v642 = vpack.c.b16 %v572, %v565
      %v643 = vpack.c.b16 %v573, %v566
      %v644 = vpack.c.b16 %v581, %v574
      %v645 = vpack.c.b16 %v582, %v575
      %v646 = vpack.c.b16 %v583, %v576
      %v647 = vpack.c.b16 %v584, %v577
      %v648 = vpack.c.b16 %v585, %v578
      %v649 = vpack.c.b16 %v586, %v579
      %v650 = vpack.c.b16 %v587, %v580
      %v651 = vpack.c.b16 %v595, %v588
      %v652 = vpack.c.b16 %v596, %v589
      %v653 = vpack.c.b16 %v597, %v590
      %v654 = vpack.c.b16 %v598, %v591
      %v655 = vpack.c.b16 %v599, %v592
      %v656 = vpack.c.b16 %v600, %v593
      %v657 = vpack.c.b16 %v601, %v594
      %v804 = vunpack.c.l.b16 %v316
      %v805 = vunpack.c.h.b16 %v316
      %v806 = vunpack.c.l.b16 %v317
      %v807 = vunpack.c.h.b16 %v317
      %v808 = vunpack.c.l.b16 %v318
      %v809 = vunpack.c.h.b16 %v318
      %v810 = vunpack.c.l.b16 %v319
      %v811 = vunpack.c.h.b16 %v319
      %v812 = vunpack.c.l.b16 %v320
      %v813 = vunpack.c.h.b16 %v320
      %v814 = vunpack.c.l.b16 %v321
      %v815 = vunpack.c.h.b16 %v321
      %v816 = vunpack.c.l.b16 %v322
      %v817 = vunpack.c.h.b16 %v322
      %v818 = vunpack.c.l.b16 %v323
      %v819 = vunpack.c.h.b16 %v323
      %v820 = vunpack.c.l.b16 %v324
      %v821 = vunpack.c.h.b16 %v324
      %v822 = vunpack.c.l.b16 %v325
      %v823 = vunpack.c.h.b16 %v325
      %v824 = vunpack.c.l.b16 %v326
      %v825 = vunpack.c.h.b16 %v326
      %v826 = vunpack.c.l.b16 %v327
      %v827 = vunpack.c.h.b16 %v327
      %v828 = vunpack.c.l.b16 %v328
      %v829 = vunpack.c.h.b16 %v328
      %v830 = vunpack.c.l.b16 %v329
      %v831 = vunpack.c.h.b16 %v329
      %v832 = vunpack.c.l.b16 %v330
      %v833 = vunpack.c.h.b16 %v330
      %v834 = vunpack.c.l.b16 %v331
      %v835 = vunpack.c.h.b16 %v331
      %v836 = vunpack.c.l.b16 %v332
      %v837 = vunpack.c.h.b16 %v332
      %v838 = vunpack.c.l.b16 %v333
      %v839 = vunpack.c.h.b16 %v333
      %v840 = vunpack.c.l.b16 %v334
      %v841 = vunpack.c.h.b16 %v334
      %v842 = vunpack.c.l.b16 %v335
      %v843 = vunpack.c.h.b16 %v335
      %v844 = vunpack.c.l.b16 %v336
      %v845 = vunpack.c.h.b16 %v336
      %v846 = vunpack.c.l.b16 %v337
      %v847 = vunpack.c.h.b16 %v337
      %v848 = vunpack.c.l.b16 %v338
      %v849 = vunpack.c.h.b16 %v338
      %v850 = vunpack.c.l.b16 %v339
      %v851 = vunpack.c.h.b16 %v339
      %v852 = vunpack.c.l.b16 %v340
      %v853 = vunpack.c.h.b16 %v340
      %v854 = vunpack.c.l.b16 %v341
      %v855 = vunpack.c.h.b16 %v341
      %v856 = vunpack.c.l.b16 %v342
      %v857 = vunpack.c.h.b16 %v342
      %v858 = vunpack.c.l.b16 %v343
      %v859 = vunpack.c.h.b16 %v343
      %v860 = vunpack.c.l.b16 %v344
      %v861 = vunpack.c.h.b16 %v344
      %v862 = vunpack.c.l.b16 %v345
      %v863 = vunpack.c.h.b16 %v345
      %v864 = vunpack.c.l.b16 %v346
      %v865 = vunpack.c.h.b16 %v346
      %v866 = vunpack.c.l.b16 %v347
      %v867 = vunpack.c.h.b16 %v347
      %v868 = vunpack.c.l.b16 %v348
      %v869 = vunpack.c.h.b16 %v348
      %v870 = vunpack.c.l.b16 %v349
      %v871 = vunpack.c.h.b16 %v349
      %v872 = vunpack.c.l.b16 %v350
      %v873 = vunpack.c.h.b16 %v350
      %v874 = vunpack.c.l.b16 %v351
      %v875 = vunpack.c.h.b16 %v351
      %v876 = vunpack.c.l.b16 %v352
      %v877 = vunpack.c.h.b16 %v352
      %v878 = vunpack.c.l.b16 %v353
      %v879 = vunpack.c.h.b16 %v353
      %v880 = vunpack.c.l.b16 %v354
      %v881 = vunpack.c.h.b16 %v354
      %v882 = vunpack.c.l.b16 %v355
      %v883 = vunpack.c.h.b16 %v355
      %v884 = vunpack.c.l.b16 %v356
      %v885 = vunpack.c.h.b16 %v356
      %v886 = vunpack.c.l.b16 %v357
      %v887 = vunpack.c.h.b16 %v357
      %v888 = vunpack.c.l.b16 %v358
      %v889 = vunpack.c.h.b16 %v358
      %v890 = vunpack.c.l.b16 %v359
      %v891 = vunpack.c.h.b16 %v359
      %v892 = vunpack.c.l.b16 %v360
      %v893 = vunpack.c.h.b16 %v360
      %v894 = vunpack.c.l.b16 %v361
      %v895 = vunpack.c.h.b16 %v361
      %v896 = vunpack.c.l.b16 %v362
      %v897 = vunpack.c.h.b16 %v362
      %v898 = vunpack.c.l.b16 %v363
      %v899 = vunpack.c.h.b16 %v363
      %v900 = vunpack.c.l.b16 %v364
      %v901 = vunpack.c.h.b16 %v364
      %v902 = vunpack.c.l.b16 %v365
      %v903 = vunpack.c.h.b16 %v365
      %v904 = vunpack.c.l.b16 %v366
      %v905 = vunpack.c.h.b16 %v366
      %v906 = vunpack.c.l.b16 %v367
      %v907 = vunpack.c.h.b16 %v367
      %v908 = vunpack.c.l.b16 %v368
      %v909 = vunpack.c.h.b16 %v368
      %v910 = vunpack.c.l.b16 %v369
      %v911 = vunpack.c.h.b16 %v369
      %v912 = vunpack.c.l.b16 %v370
      %v913 = vunpack.c.h.b16 %v370
      %v914 = vunpack.c.l.b16 %v371
      %v915 = vunpack.c.h.b16 %v371
      %v916 = vunpack.c.l.b16 %v372
      %v917 = vunpack.c.h.b16 %v372
      %v918 = vunpack.c.l.b16 %v373
      %v919 = vunpack.c.h.b16 %v373
      %v920 = vunpack.c.l.b16 %v374
      %v921 = vunpack.c.h.b16 %v374
      %v922 = vunpack.c.l.b16 %v375
      %v923 = vunpack.c.h.b16 %v375
      %v924 = vunpack.c.l.b16 %v376
      %v925 = vunpack.c.h.b16 %v376
      %v926 = vunpack.c.l.b16 %v377
      %v927 = vunpack.c.h.b16 %v377
      %v928 = vunpack.c.l.b16 %v378
      %v929 = vunpack.c.h.b16 %v378
      %v930 = vunpack.c.l.b16 %v379
      %v931 = vunpack.c.h.b16 %v379
      %v932 = vunpack.c.l.b16 %v380
      %v933 = vunpack.c.h.b16 %v380
      %v934 = vunpack.c.l.b16 %v381
      %v935 = vunpack.c.h.b16 %v381
      %v936 = vunpack.c.l.b16 %v382
      %v937 = vunpack.c.h.b16 %v382
      %v938 = vunpack.c.l.b16 %v383
      %v939 = vunpack.c.h.b16 %v383
      %v940 = vunpack.c.l.b16 %v384
      %v941 = vunpack.c.h.b16 %v384
      %v942 = vunpack.c.l.b16 %v385
      %v943 = vunpack.c.h.b16 %v385
      %v944 = vunpack.c.l.b16 %v386
      %v945 = vunpack.c.h.b16 %v386
      %v946 = vunpack.c.l.b16 %v387
      %v947 = vunpack.c.h.b16 %v387
      %v948 = vunpack.c.l.b16 %v388
      %v949 = vunpack.c.h.b16 %v388
      %v950 = vunpack.c.l.b16 %v389
      %v951 = vunpack.c.h.b16 %v389
      %v952 = vunpack.c.l.b16 %v390
      %v953 = vunpack.c.h.b16 %v390
      %v954 = vunpack.c.l.b16 %v391
      %v955 = vunpack.c.h.b16 %v391
      %v956 = vunpack.c.l.b16 %v392
      %v957 = vunpack.c.h.b16 %v392
      %v958 = vunpack.c.l.b16 %v393
      %v959 = vunpack.c.h.b16 %v393
      %v960 = vunpack.c.l.b16 %v394
      %v961 = vunpack.c.h.b16 %v394
      %v962 = vunpack.c.l.b16 %v395
      %v963 = vunpack.c.h.b16 %v395
      %v964 = vunpack.c.l.b16 %v396
      %v965 = vunpack.c.h.b16 %v396
      %v966 = vunpack.c.l.b16 %v397
      %v967 = vunpack.c.h.b16 %v397
      %v968 = vunpack.c.l.b16 %v398
      %v969 = vunpack.c.h.b16 %v398
      %v970 = vunpack.c.l.b16 %v399
      %v971 = vunpack.c.h.b16 %v399
      %v972 = vunpack.c.l.b16 %v400
      %v973 = vunpack.c.h.b16 %v400
      %v974 = vunpack.c.l.b16 %v401
      %v975 = vunpack.c.h.b16 %v401
      %v976 = vunpack.c.l.b16 %v402
      %v977 = vunpack.c.h.b16 %v402
      %v978 = vunpack.c.l.b16 %v403
      %v979 = vunpack.c.h.b16 %v403
      %v980 = vunpack.c.l.b16 %v404
      %v981 = vunpack.c.h.b16 %v404
      %v982 = vunpack.c.l.b16 %v405
      %v983 = vunpack.c.h.b16 %v405
      %v984 = vunpack.c.l.b16 %v406
      %v985 = vunpack.c.h.b16 %v406
      %v986 = vunpack.c.l.b16 %v407
      %v987 = vunpack.c.h.b16 %v407
      %v988 = vunpack.c.l.b16 %v408
      %v989 = vunpack.c.h.b16 %v408
      %v990 = vunpack.c.l.b16 %v409
      %v991 = vunpack.c.h.b16 %v409
      %v992 = vunpack.c.l.b16 %v410
      %v993 = vunpack.c.h.b16 %v410
      %v994 = vunpack.c.l.b16 %v411
      %v995 = vunpack.c.h.b16 %v411
      %v996 = vunpack.c.l.b16 %v412
      %v997 = vunpack.c.h.b16 %v412
      %v998 = vunpack.c.l.b16 %v413
      %v999 = vunpack.c.h.b16 %v413
      %v1000 = vpack.c.b16 %v806, %v804
      %v1001 = vpack.c.b16 %v807, %v805
      %v1002 = vpack.c.b16 %v810, %v808
      %v1003 = vpack.c.b16 %v811, %v809
      %v1004 = vpack.c.b16 %v814, %v812
      %v1005 = vpack.c.b16 %v815, %v813
      %v1006 = vpack.c.b16 %v818, %v816
      %v1007 = vpack.c.b16 %v819, %v817
      %v1008 = vpack.c.b16 %v822, %v820
      %v1009 = vpack.c.b16 %v823, %v821
      %v1010 = vpack.c.b16 %v826, %v824
      %v1011 = vpack.c.b16 %v827, %v825
      %v1012 = vpack.c.b16 %v830, %v828
      %v1013 = vpack.c.b16 %v831, %v829
      %v1014 = vpack.c.b16 %v834, %v832
      %v1015 = vpack.c.b16 %v835, %v833
      %v1016 = vpack.c.b16 %v838, %v836
      %v1017 = vpack.c.b16 %v839, %v837
      %v1018 = vpack.c.b16 %v842, %v840
      %v1019 = vpack.c.b16 %v843, %v841
      %v1020 = vpack.c.b16 %v846, %v844
      %v1021 = vpack.c.b16 %v847, %v845
      %v1022 = vpack.c.b16 %v850, %v848
      %v1023 = vpack.c.b16 %v851, %v849
      %v1024 = vpack.c.b16 %v854, %v852
      %v1025 = vpack.c.b16 %v855, %v853
      %v1026 = vpack.c.b16 %v858, %v856
      %v1027 = vpack.c.b16 %v859, %v857
      %v1028 = vpack.c.b16 %v862, %v860
      %v1029 = vpack.c.b16 %v863, %v861
      %v1030 = vpack.c.b16 %v866, %v864
      %v1031 = vpack.c.b16 %v867, %v865
      %v1032 = vpack.c.b16 %v870, %v868
      %v1033 = vpack.c.b16 %v871, %v869
      %v1034 = vpack.c.b16 %v874, %v872
      %v1035 = vpack.c.b16 %v875, %v873
      %v1036 = vpack.c.b16 %v878, %v876
      %v1037 = vpack.c.b16 %v879, %v877
      %v1038 = vpack.c.b16 %v882, %v880
      %v1039 = vpack.c.b16 %v883, %v881
      %v1040 = vpack.c.b16 %v886, %v884
      %v1041 = vpack.c.b16 %v887, %v885
      %v1042 = vpack.c.b16 %v890, %v888
      %v1043 = vpack.c.b16 %v891, %v889
      %v1044 = vpack.c.b16 %v894, %v892
      %v1045 = vpack.c.b16 %v895, %v893
      %v1046 = vpack.c.b16 %v898, %v896
      %v1047 = vpack.c.b16 %v899, %v897
      %v1048 = vpack.c.b16 %v902, %v900
      %v1049 = vpack.c.b16 %v903, %v901
      %v1050 = vpack.c.b16 %v906, %v904
      %v1051 = vpack.c.b16 %v907, %v905
      %v1052 = vpack.c.b16 %v910, %v908
      %v1053 = vpack.c.b16 %v911, %v909
      %v1054 = vpack.c.b16 %v914, %v912
      %v1055 = vpack.c.b16 %v915, %v913
      %v1056 = vpack.c.b16 %v918, %v916
      %v1057 = vpack.c.b16 %v919, %v917
      %v1058 = vpack.c.b16 %v922, %v920
      %v1059 = vpack.c.b16 %v923, %v921
      %v1060 = vpack.c.b16 %v926, %v924
      %v1061 = vpack.c.b16 %v927, %v925
      %v1062 = vpack.c.b16 %v930, %v928
      %v1063 = vpack.c.b16 %v931, %v929
      %v1064 = vpack.c.b16 %v934, %v932
      %v1065 = vpack.c.b16 %v935, %v933
      %v1066 = vpack.c.b16 %v938, %v936
      %v1067 = vpack.c.b16 %v939, %v937
      %v1068 = vpack.c.b16 %v942, %v940
      %v1069 = vpack.c.b16 %v943, %v941
      %v1070 = vpack.c.b16 %v946, %v944
      %v1071 = vpack.c.b16 %v947, %v945
      %v1072 = vpack.c.b16 %v950, %v948
      %v1073 = vpack.c.b16 %v951, %v949
      %v1074 = vpack.c.b16 %v954, %v952
      %v1075 = vpack.c.b16 %v955, %v953
      %v1076 = vpack.c.b16 %v958, %v956
      %v1077 = vpack.c.b16 %v959, %v957
      %v1078 = vpack.c.b16 %v962, %v960
      %v1079 = vpack.c.b16 %v963, %v961
      %v1080 = vpack.c.b16 %v966, %v964
      %v1081 = vpack.c.b16 %v967, %v965
      %v1082 = vpack.c.b16 %v970, %v968
      %v1083 = vpack.c.b16 %v971, %v969
      %v1084 = vpack.c.b16 %v974, %v972
      %v1085 = vpack.c.b16 %v975, %v973
      %v1086 = vpack.c.b16 %v978, %v976
      %v1087 = vpack.c.b16 %v979, %v977
      %v1088 = vpack.c.b16 %v982, %v980
      %v1089 = vpack.c.b16 %v983, %v981
      %v1090 = vpack.c.b16 %v986, %v984
      %v1091 = vpack.c.b16 %v987, %v985
      %v1092 = vpack.c.b16 %v990, %v988
      %v1093 = vpack.c.b16 %v991, %v989
      %v1094 = vpack.c.b16 %v994, %v992
      %v1095 = vpack.c.b16 %v995, %v993
      %v1096 = vpack.c.b16 %v998, %v996
      %v1097 = vpack.c.b16 %v999, %v997
      %vm1196 = vcmask 130048
      %v1198 = vsel %vm1196, %v608, 0
      %v1201 = vsel %vm1196, %v615, 0
      %v1204 = vsel %vm1196, %v622, 0
      %v1207 = vsel %vm1196, %v629, 0
      %v1210 = vsel %vm1196, %v636, 0
      %v1213 = vsel %vm1196, %v643, 0
      %v1216 = vsel %vm1196, %v650, 0
      %v1219 = vsel %vm1196, %v657, 0
      %1221 = vmatprep.subr.bf16.mxu0 %v1001
      %1222 = vmatpush1.bf16.msra.mxu0 %v1000
      %1223 = vmatprep.subr.bf16.mxu0 %v1003
      %1224 = vmatpush1.bf16.msra.mxu0 %v1002
      %1225 = vmatprep.subr.bf16.mxu0 %v1005
      %1226 = vmatpush1.bf16.msra.mxu0 %v1004
      %1227 = vmatprep.subr.bf16.mxu0 %v1007
      %1228 = vmatpush1.bf16.msra.mxu0 %v1006
      %1229 = vmatprep.subr.bf16.mxu0 %v1009
      %1230 = vmatpush1.bf16.msra.mxu0 %v1008
      %1231 = vmatprep.subr.bf16.mxu0 %v1011
      %1232 = vmatpush1.bf16.msra.mxu0 %v1010
      %1233 = vmatprep.subr.bf16.mxu0 %v1013
      %1234 = vmatpush1.bf16.msra.mxu0 %v1012
      %1235 = vmatprep.subr.bf16.mxu0 %v1015
      %1236 = vmatpush1.bf16.msra.mxu0 %v1014
      %1237 = vmatprep.subr.bf16.mxu0 %v1017
      %1238 = vmatpush1.bf16.msra.mxu0 %v1016
      %1239 = vmatprep.subr.bf16.mxu0 %v1019
      %1240 = vmatpush1.bf16.msra.mxu0 %v1018
      %1241 = vmatprep.subr.bf16.mxu0 %v1021
      %1242 = vmatpush1.bf16.msra.mxu0 %v1020
      %1243 = vmatprep.subr.bf16.mxu0 %v1023
      %1244 = vmatpush1.bf16.msra.mxu0 %v1022
      %1245 = vmatprep.subr.bf16.mxu0 %v1025
      %1246 = vmatpush1.bf16.msra.mxu0 %v1024
      %1247 = vmatprep.subr.bf16.mxu0 %v1027
      %1248 = vmatpush1.bf16.msra.mxu0 %v1026
      %1249 = vmatprep.subr.bf16.mxu0 %v1029
      %1250 = vmatpush1.bf16.msra.mxu0 %v1028
      %1251 = vmatprep.subr.bf16.mxu0 %v1031
      %1252 = vmatpush1.bf16.msra.mxu0 %v1030
      %1253 = vmatprep.mubr.bf16.mxu0 %v603
      %1254 = vmatmul.mubr.bf16.gmra.mrb[0].mxu0 %v602
      %v1255 = vpop.f32.mrb[0].mxu0
      %v1256 = vadd.f32 %v419, %v1255
      %v1257 = vpop.f32.mrb[0].mxu0
      %v1258 = vadd.f32 %v423, %v1257
      %v1259 = vpop.f32.mrb[0].mxu0
      %v1260 = vadd.f32 %v419, %v1259
      %v1261 = vpop.f32.mrb[0].mxu0
      %v1262 = vadd.f32 %v423, %v1261
      %1263 = vmatprep.mubr.bf16.mxu0 %v610
      %1264 = vmatmul.mubr.bf16.gmra.mrb[0].mxu0 %v609
      %v1265 = vpop.f32.mrb[0].mxu0
      %v1266 = vadd.f32 %v419, %v1265
      %v1267 = vpop.f32.mrb[0].mxu0
      %v1268 = vadd.f32 %v423, %v1267
      %v1269 = vpop.f32.mrb[0].mxu0
      %v1270 = vadd.f32 %v419, %v1269
      %v1271 = vpop.f32.mrb[0].mxu0
      %v1272 = vadd.f32 %v423, %v1271
      %1273 = vmatprep.mubr.bf16.mxu0 %v617
      %1274 = vmatmul.mubr.bf16.gmra.mrb[0].mxu0 %v616
      %v1275 = vpop.f32.mrb[0].mxu0
      %v1276 = vadd.f32 %v419, %v1275
      %v1277 = vpop.f32.mrb[0].mxu0
      %v1278 = vadd.f32 %v423, %v1277
      %v1279 = vpop.f32.mrb[0].mxu0
      %v1280 = vadd.f32 %v419, %v1279
      %v1281 = vpop.f32.mrb[0].mxu0
      %v1282 = vadd.f32 %v423, %v1281
      %1283 = vmatprep.mubr.bf16.mxu0 %v624
      %1284 = vmatmul.mubr.bf16.gmra.mrb[0].mxu0 %v623
      %v1285 = vpop.f32.mrb[0].mxu0
      %v1286 = vadd.f32 %v419, %v1285
      %v1287 = vpop.f32.mrb[0].mxu0
      %v1288 = vadd.f32 %v423, %v1287
      %v1289 = vpop.f32.mrb[0].mxu0
      %v1290 = vadd.f32 %v419, %v1289
      %v1291 = vpop.f32.mrb[0].mxu0
      %v1292 = vadd.f32 %v423, %v1291
      %1293 = vmatprep.mubr.bf16.mxu0 %v631
      %1294 = vmatmul.mubr.bf16.gmra.mrb[0].mxu0 %v630
      %v1295 = vpop.f32.mrb[0].mxu0
      %v1296 = vadd.f32 %v419, %v1295
      %v1297 = vpop.f32.mrb[0].mxu0
      %v1298 = vadd.f32 %v423, %v1297
      %v1299 = vpop.f32.mrb[0].mxu0
      %v1300 = vadd.f32 %v419, %v1299
      %v1301 = vpop.f32.mrb[0].mxu0
      %v1302 = vadd.f32 %v423, %v1301
      %1303 = vmatprep.mubr.bf16.mxu0 %v638
      %1304 = vmatmul.mubr.bf16.gmra.mrb[0].mxu0 %v637
      %v1305 = vpop.f32.mrb[0].mxu0
      %v1306 = vadd.f32 %v419, %v1305
      %v1307 = vpop.f32.mrb[0].mxu0
      %v1308 = vadd.f32 %v423, %v1307
      %v1309 = vpop.f32.mrb[0].mxu0
      %v1310 = vadd.f32 %v419, %v1309
      %v1311 = vpop.f32.mrb[0].mxu0
      %v1312 = vadd.f32 %v423, %v1311
      %1313 = vmatprep.mubr.bf16.mxu0 %v645
      %1314 = vmatmul.mubr.bf16.gmra.mrb[0].mxu0 %v644
      %v1315 = vpop.f32.mrb[0].mxu0
      %v1316 = vadd.f32 %v419, %v1315
      %v1317 = vpop.f32.mrb[0].mxu0
      %v1318 = vadd.f32 %v423, %v1317
      %v1319 = vpop.f32.mrb[0].mxu0
      %v1320 = vadd.f32 %v419, %v1319
      %v1321 = vpop.f32.mrb[0].mxu0
      %v1322 = vadd.f32 %v423, %v1321
      %1323 = vmatprep.mubr.bf16.mxu0 %v652
      %1324 = vmatmul.mubr.bf16.gmra.mrb[0].mxu0 %v651
      %v1325 = vpop.f32.mrb[0].mxu0
      %v1326 = vadd.f32 %v419, %v1325
      %v1327 = vpop.f32.mrb[0].mxu0
      %v1328 = vadd.f32 %v423, %v1327
      %v1329 = vpop.f32.mrb[0].mxu0
      %v1330 = vadd.f32 %v419, %v1329
      %v1331 = vpop.f32.mrb[0].mxu0
      %v1332 = vadd.f32 %v423, %v1331
      %1333 = vdwg.mxu0
      %1334 = vmatprep.subr.bf16.mxu0 %v1033
      %1335 = vmatpush1.bf16.msra.mxu0 %v1032
      %1336 = vmatprep.subr.bf16.mxu0 %v1035
      %1337 = vmatpush1.bf16.msra.mxu0 %v1034
      %1338 = vmatprep.subr.bf16.mxu0 %v1037
      %1339 = vmatpush1.bf16.msra.mxu0 %v1036
      %1340 = vmatprep.subr.bf16.mxu0 %v1039
      %1341 = vmatpush1.bf16.msra.mxu0 %v1038
      %1342 = vmatprep.subr.bf16.mxu0 %v1041
      %1343 = vmatpush1.bf16.msra.mxu0 %v1040
      %1344 = vmatprep.subr.bf16.mxu0 %v1043
      %1345 = vmatpush1.bf16.msra.mxu0 %v1042
      %1346 = vmatprep.subr.bf16.mxu0 %v1045
      %1347 = vmatpush1.bf16.msra.mxu0 %v1044
      %1348 = vmatprep.subr.bf16.mxu0 %v1047
      %1349 = vmatpush1.bf16.msra.mxu0 %v1046
      %1350 = vmatprep.subr.bf16.mxu0 %v1049
      %1351 = vmatpush1.bf16.msra.mxu0 %v1048
      %1352 = vmatprep.subr.bf16.mxu0 %v1051
      %1353 = vmatpush1.bf16.msra.mxu0 %v1050
      %1354 = vmatprep.subr.bf16.mxu0 %v1053
      %1355 = vmatpush1.bf16.msra.mxu0 %v1052
      %1356 = vmatprep.subr.bf16.mxu0 %v1055
      %1357 = vmatpush1.bf16.msra.mxu0 %v1054
      %1358 = vmatprep.subr.bf16.mxu0 %v1057
      %1359 = vmatpush1.bf16.msra.mxu0 %v1056
      %1360 = vmatprep.subr.bf16.mxu0 %v1059
      %1361 = vmatpush1.bf16.msra.mxu0 %v1058
      %1362 = vmatprep.subr.bf16.mxu0 %v1061
      %1363 = vmatpush1.bf16.msra.mxu0 %v1060
      %1364 = vmatprep.subr.bf16.mxu0 %v1063
      %1365 = vmatpush1.bf16.msra.mxu0 %v1062
      %1366 = vmatprep.mubr.bf16.mxu0 %v605
      %1367 = vmatmul.mubr.bf16.gmra.mrb[0].mxu0 %v604
      %v1368 = vpop.f32.mrb[0].mxu0
      %v1369 = vadd.f32 %v1256, %v1368
      %v1370 = vpop.f32.mrb[0].mxu0
      %v1371 = vadd.f32 %v1258, %v1370
      %v1372 = vpop.f32.mrb[0].mxu0
      %v1373 = vadd.f32 %v1260, %v1372
      %v1374 = vpop.f32.mrb[0].mxu0
      %v1375 = vadd.f32 %v1262, %v1374
      %1376 = vmatprep.mubr.bf16.mxu0 %v612
      %1377 = vmatmul.mubr.bf16.gmra.mrb[0].mxu0 %v611
      %v1378 = vpop.f32.mrb[0].mxu0
      %v1379 = vadd.f32 %v1266, %v1378
      %v1380 = vpop.f32.mrb[0].mxu0
      %v1381 = vadd.f32 %v1268, %v1380
      %v1382 = vpop.f32.mrb[0].mxu0
      %v1383 = vadd.f32 %v1270, %v1382
      %v1384 = vpop.f32.mrb[0].mxu0
      %v1385 = vadd.f32 %v1272, %v1384
      %1386 = vmatprep.mubr.bf16.mxu0 %v619
      %1387 = vmatmul.mubr.bf16.gmra.mrb[0].mxu0 %v618
      %v1388 = vpop.f32.mrb[0].mxu0
      %v1389 = vadd.f32 %v1276, %v1388
      %v1390 = vpop.f32.mrb[0].mxu0
      %v1391 = vadd.f32 %v1278, %v1390
      %v1392 = vpop.f32.mrb[0].mxu0
      %v1393 = vadd.f32 %v1280, %v1392
      %v1394 = vpop.f32.mrb[0].mxu0
      %v1395 = vadd.f32 %v1282, %v1394
      %1396 = vmatprep.mubr.bf16.mxu0 %v626
      %1397 = vmatmul.mubr.bf16.gmra.mrb[0].mxu0 %v625
      %v1398 = vpop.f32.mrb[0].mxu0
      %v1399 = vadd.f32 %v1286, %v1398
      %v1400 = vpop.f32.mrb[0].mxu0
      %v1401 = vadd.f32 %v1288, %v1400
      %v1402 = vpop.f32.mrb[0].mxu0
      %v1403 = vadd.f32 %v1290, %v1402
      %v1404 = vpop.f32.mrb[0].mxu0
      %v1405 = vadd.f32 %v1292, %v1404
      %1406 = vmatprep.mubr.bf16.mxu0 %v633
      %1407 = vmatmul.mubr.bf16.gmra.mrb[0].mxu0 %v632
      %v1408 = vpop.f32.mrb[0].mxu0
      %v1409 = vadd.f32 %v1296, %v1408
      %v1410 = vpop.f32.mrb[0].mxu0
      %v1411 = vadd.f32 %v1298, %v1410
      %v1412 = vpop.f32.mrb[0].mxu0
      %v1413 = vadd.f32 %v1300, %v1412
      %v1414 = vpop.f32.mrb[0].mxu0
      %v1415 = vadd.f32 %v1302, %v1414
      %1416 = vmatprep.mubr.bf16.mxu0 %v640
      %1417 = vmatmul.mubr.bf16.gmra.mrb[0].mxu0 %v639
      %v1418 = vpop.f32.mrb[0].mxu0
      %v1419 = vadd.f32 %v1306, %v1418
      %v1420 = vpop.f32.mrb[0].mxu0
      %v1421 = vadd.f32 %v1308, %v1420
      %v1422 = vpop.f32.mrb[0].mxu0
      %v1423 = vadd.f32 %v1310, %v1422
      %v1424 = vpop.f32.mrb[0].mxu0
      %v1425 = vadd.f32 %v1312, %v1424
      %1426 = vmatprep.mubr.bf16.mxu0 %v647
      %1427 = vmatmul.mubr.bf16.gmra.mrb[0].mxu0 %v646
      %v1428 = vpop.f32.mrb[0].mxu0
      %v1429 = vadd.f32 %v1316, %v1428
      %v1430 = vpop.f32.mrb[0].mxu0
      %v1431 = vadd.f32 %v1318, %v1430
      %v1432 = vpop.f32.mrb[0].mxu0
      %v1433 = vadd.f32 %v1320, %v1432
      %v1434 = vpop.f32.mrb[0].mxu0
      %v1435 = vadd.f32 %v1322, %v1434
      %1436 = vmatprep.mubr.bf16.mxu0 %v654
      %1437 = vmatmul.mubr.bf16.gmra.mrb[0].mxu0 %v653
      %v1438 = vpop.f32.mrb[0].mxu0
      %v1439 = vadd.f32 %v1326, %v1438
      %v1440 = vpop.f32.mrb[0].mxu0
      %v1441 = vadd.f32 %v1328, %v1440
      %v1442 = vpop.f32.mrb[0].mxu0
      %v1443 = vadd.f32 %v1330, %v1442
      %v1444 = vpop.f32.mrb[0].mxu0
      %v1445 = vadd.f32 %v1332, %v1444
      %1446 = vdwg.mxu0
      %1447 = vmatprep.subr.bf16.mxu0 %v1065
      %1448 = vmatpush1.bf16.msra.mxu0 %v1064
      %1449 = vmatprep.subr.bf16.mxu0 %v1067
      %1450 = vmatpush1.bf16.msra.mxu0 %v1066
      %1451 = vmatprep.subr.bf16.mxu0 %v1069
      %1452 = vmatpush1.bf16.msra.mxu0 %v1068
      %1453 = vmatprep.subr.bf16.mxu0 %v1071
      %1454 = vmatpush1.bf16.msra.mxu0 %v1070
      %1455 = vmatprep.subr.bf16.mxu0 %v1073
      %1456 = vmatpush1.bf16.msra.mxu0 %v1072
      %1457 = vmatprep.subr.bf16.mxu0 %v1075
      %1458 = vmatpush1.bf16.msra.mxu0 %v1074
      %1459 = vmatprep.subr.bf16.mxu0 %v1077
      %1460 = vmatpush1.bf16.msra.mxu0 %v1076
      %1461 = vmatprep.subr.bf16.mxu0 %v1079
      %1462 = vmatpush1.bf16.msra.mxu0 %v1078
      %1463 = vmatprep.subr.bf16.mxu0 %v1081
      %1464 = vmatpush1.bf16.msra.mxu0 %v1080
      %1465 = vmatprep.subr.bf16.mxu0 %v1083
      %1466 = vmatpush1.bf16.msra.mxu0 %v1082
      %1467 = vmatprep.subr.bf16.mxu0 %v1085
      %1468 = vmatpush1.bf16.msra.mxu0 %v1084
      %1469 = vmatprep.subr.bf16.mxu0 %v1087
      %1470 = vmatpush1.bf16.msra.mxu0 %v1086
      %1471 = vmatprep.subr.bf16.mxu0 %v1089
      %1472 = vmatpush1.bf16.msra.mxu0 %v1088
      %1473 = vmatprep.subr.bf16.mxu0 %v1091
      %1474 = vmatpush1.bf16.msra.mxu0 %v1090
      %1475 = vmatprep.subr.bf16.mxu0 %v1093
      %1476 = vmatpush1.bf16.msra.mxu0 %v1092
      %1477 = vmatprep.subr.bf16.mxu0 %v1095
      %1478 = vmatpush1.bf16.msra.mxu0 %v1094
      %1479 = vmatprep.mubr.bf16.mxu0 %v607
      %1480 = vmatmul.mubr.bf16.gmra.mrb[0].mxu0 %v606
      %v1481 = vpop.f32.mrb[0].mxu0
      %v1482 = vadd.f32 %v1369, %v1481
      %v1483 = vpop.f32.mrb[0].mxu0
      %v1484 = vadd.f32 %v1371, %v1483
      %v1485 = vpop.f32.mrb[0].mxu0
      %v1486 = vadd.f32 %v1373, %v1485
      %v1487 = vpop.f32.mrb[0].mxu0
      %v1488 = vadd.f32 %v1375, %v1487
      %1489 = vmatprep.mubr.bf16.mxu0 %v614
      %1490 = vmatmul.mubr.bf16.gmra.mrb[0].mxu0 %v613
      %v1491 = vpop.f32.mrb[0].mxu0
      %v1492 = vadd.f32 %v1379, %v1491
      %v1493 = vpop.f32.mrb[0].mxu0
      %v1494 = vadd.f32 %v1381, %v1493
      %v1495 = vpop.f32.mrb[0].mxu0
      %v1496 = vadd.f32 %v1383, %v1495
      %v1497 = vpop.f32.mrb[0].mxu0
      %v1498 = vadd.f32 %v1385, %v1497
      %1499 = vmatprep.mubr.bf16.mxu0 %v621
      %1500 = vmatmul.mubr.bf16.gmra.mrb[0].mxu0 %v620
      %v1501 = vpop.f32.mrb[0].mxu0
      %v1502 = vadd.f32 %v1389, %v1501
      %v1503 = vpop.f32.mrb[0].mxu0
      %v1504 = vadd.f32 %v1391, %v1503
      %v1505 = vpop.f32.mrb[0].mxu0
      %v1506 = vadd.f32 %v1393, %v1505
      %v1507 = vpop.f32.mrb[0].mxu0
      %v1508 = vadd.f32 %v1395, %v1507
      %1509 = vmatprep.mubr.bf16.mxu0 %v628
      %1510 = vmatmul.mubr.bf16.gmra.mrb[0].mxu0 %v627
      %v1511 = vpop.f32.mrb[0].mxu0
      %v1512 = vadd.f32 %v1399, %v1511
      %v1513 = vpop.f32.mrb[0].mxu0
      %v1514 = vadd.f32 %v1401, %v1513
      %v1515 = vpop.f32.mrb[0].mxu0
      %v1516 = vadd.f32 %v1403, %v1515
      %v1517 = vpop.f32.mrb[0].mxu0
      %v1518 = vadd.f32 %v1405, %v1517
      %1519 = vmatprep.mubr.bf16.mxu0 %v635
      %1520 = vmatmul.mubr.bf16.gmra.mrb[0].mxu0 %v634
      %v1521 = vpop.f32.mrb[0].mxu0
      %v1522 = vadd.f32 %v1409, %v1521
      %v1523 = vpop.f32.mrb[0].mxu0
      %v1524 = vadd.f32 %v1411, %v1523
      %v1525 = vpop.f32.mrb[0].mxu0
      %v1526 = vadd.f32 %v1413, %v1525
      %v1527 = vpop.f32.mrb[0].mxu0
      %v1528 = vadd.f32 %v1415, %v1527
      %1529 = vmatprep.mubr.bf16.mxu0 %v642
      %1530 = vmatmul.mubr.bf16.gmra.mrb[0].mxu0 %v641
      %v1531 = vpop.f32.mrb[0].mxu0
      %v1532 = vadd.f32 %v1419, %v1531
      %v1533 = vpop.f32.mrb[0].mxu0
      %v1534 = vadd.f32 %v1421, %v1533
      %v1535 = vpop.f32.mrb[0].mxu0
      %v1536 = vadd.f32 %v1423, %v1535
      %v1537 = vpop.f32.mrb[0].mxu0
      %v1538 = vadd.f32 %v1425, %v1537
      %1539 = vmatprep.mubr.bf16.mxu0 %v649
      %1540 = vmatmul.mubr.bf16.gmra.mrb[0].mxu0 %v648
      %v1541 = vpop.f32.mrb[0].mxu0
      %v1542 = vadd.f32 %v1429, %v1541
      %v1543 = vpop.f32.mrb[0].mxu0
      %v1544 = vadd.f32 %v1431, %v1543
      %v1545 = vpop.f32.mrb[0].mxu0
      %v1546 = vadd.f32 %v1433, %v1545
      %v1547 = vpop.f32.mrb[0].mxu0
      %v1548 = vadd.f32 %v1435, %v1547
      %1549 = vmatprep.mubr.bf16.mxu0 %v656
      %1550 = vmatmul.mubr.bf16.gmra.mrb[0].mxu0 %v655
      %v1551 = vpop.f32.mrb[0].mxu0
      %v1552 = vadd.f32 %v1439, %v1551
      %v1553 = vpop.f32.mrb[0].mxu0
      %v1554 = vadd.f32 %v1441, %v1553
      %v1555 = vpop.f32.mrb[0].mxu0
      %v1556 = vadd.f32 %v1443, %v1555
      %v1557 = vpop.f32.mrb[0].mxu0
      %v1558 = vadd.f32 %v1445, %v1557
      %1559 = vdwg.mxu0
      %1560 = vmatprep.subr.bf16.mxu0 %v1097
      %1561 = vmatpush1.bf16.msra.mxu0 %v1096
      %1562 = vmatprep.subr.bf16.mxu0 0
      %1563 = vmatpush1.bf16.msra.mxu0 0
      %1564 = vmatprep.subr.bf16.mxu0 0
      %1565 = vmatpush1.bf16.msra.mxu0 0
      %1566 = vmatprep.subr.bf16.mxu0 0
      %1567 = vmatpush1.bf16.msra.mxu0 0
      %1568 = vmatprep.subr.bf16.mxu0 0
      %1569 = vmatpush1.bf16.msra.mxu0 0
      %1570 = vmatprep.subr.bf16.mxu0 0
      %1571 = vmatpush1.bf16.msra.mxu0 0
      %1572 = vmatprep.subr.bf16.mxu0 0
      %1573 = vmatpush1.bf16.msra.mxu0 0
      %1574 = vmatprep.subr.bf16.mxu0 0
      %1575 = vmatpush1.bf16.msra.mxu0 0
      %1576 = vmatprep.subr.bf16.mxu0 0
      %1577 = vmatpush1.bf16.msra.mxu0 0
      %1578 = vmatprep.subr.bf16.mxu0 0
      %1579 = vmatpush1.bf16.msra.mxu0 0
      %1580 = vmatprep.subr.bf16.mxu0 0
      %1581 = vmatpush1.bf16.msra.mxu0 0
      %1582 = vmatprep.subr.bf16.mxu0 0
      %1583 = vmatpush1.bf16.msra.mxu0 0
      %1584 = vmatprep.subr.bf16.mxu0 0
      %1585 = vmatpush1.bf16.msra.mxu0 0
      %1586 = vmatprep.subr.bf16.mxu0 0
      %1587 = vmatpush1.bf16.msra.mxu0 0
      %1588 = vmatprep.subr.bf16.mxu0 0
      %1589 = vmatpush1.bf16.msra.mxu0 0
      %1590 = vmatprep.subr.bf16.mxu0 0
      %1591 = vmatpush1.bf16.msra.mxu0 0
      %1592 = vmatprep.mubr.bf16.mxu0 0
      %1593 = vmatmul.mubr.bf16.gmra.mrb[0].mxu0 %v1198
      %v1594 = vpop.f32.mrb[0].mxu0
      %v1595 = vadd.f32 %v1482, %v1594
      %v1596 = vpop.f32.mrb[0].mxu0
      %v1597 = vadd.f32 %v1484, %v1596
      %v1598 = vpop.f32.mrb[0].mxu0
      %v1599 = vadd.f32 %v1486, %v1598
      %v1600 = vpop.f32.mrb[0].mxu0
      %v1601 = vadd.f32 %v1488, %v1600
      %1602 = vmatprep.mubr.bf16.mxu0 0
      %1603 = vmatmul.mubr.bf16.gmra.mrb[0].mxu0 %v1201
      %v1604 = vpop.f32.mrb[0].mxu0
      %v1605 = vadd.f32 %v1492, %v1604
      %v1606 = vpop.f32.mrb[0].mxu0
      %v1607 = vadd.f32 %v1494, %v1606
      %v1608 = vpop.f32.mrb[0].mxu0
      %v1609 = vadd.f32 %v1496, %v1608
      %v1610 = vpop.f32.mrb[0].mxu0
      %v1611 = vadd.f32 %v1498, %v1610
      %1612 = vmatprep.mubr.bf16.mxu0 0
      %1613 = vmatmul.mubr.bf16.gmra.mrb[0].mxu0 %v1204
      %v1614 = vpop.f32.mrb[0].mxu0
      %v1615 = vadd.f32 %v1502, %v1614
      %v1616 = vpop.f32.mrb[0].mxu0
      %v1617 = vadd.f32 %v1504, %v1616
      %v1618 = vpop.f32.mrb[0].mxu0
      %v1619 = vadd.f32 %v1506, %v1618
      %v1620 = vpop.f32.mrb[0].mxu0
      %v1621 = vadd.f32 %v1508, %v1620
      %1622 = vmatprep.mubr.bf16.mxu0 0
      %1623 = vmatmul.mubr.bf16.gmra.mrb[0].mxu0 %v1207
      %v1624 = vpop.f32.mrb[0].mxu0
      %v1625 = vadd.f32 %v1512, %v1624
      %v1626 = vpop.f32.mrb[0].mxu0
      %v1627 = vadd.f32 %v1514, %v1626
      %v1628 = vpop.f32.mrb[0].mxu0
      %v1629 = vadd.f32 %v1516, %v1628
      %v1630 = vpop.f32.mrb[0].mxu0
      %v1631 = vadd.f32 %v1518, %v1630
      %1632 = vmatprep.mubr.bf16.mxu0 0
      %1633 = vmatmul.mubr.bf16.gmra.mrb[0].mxu0 %v1210
      %v1634 = vpop.f32.mrb[0].mxu0
      %v1635 = vadd.f32 %v1522, %v1634
      %v1636 = vpop.f32.mrb[0].mxu0
      %v1637 = vadd.f32 %v1524, %v1636
      %v1638 = vpop.f32.mrb[0].mxu0
      %v1639 = vadd.f32 %v1526, %v1638
      %v1640 = vpop.f32.mrb[0].mxu0
      %v1641 = vadd.f32 %v1528, %v1640
      %1642 = vmatprep.mubr.bf16.mxu0 0
      %1643 = vmatmul.mubr.bf16.gmra.mrb[0].mxu0 %v1213
      %v1644 = vpop.f32.mrb[0].mxu0
      %v1645 = vadd.f32 %v1532, %v1644
      %v1646 = vpop.f32.mrb[0].mxu0
      %v1647 = vadd.f32 %v1534, %v1646
      %v1648 = vpop.f32.mrb[0].mxu0
      %v1649 = vadd.f32 %v1536, %v1648
      %v1650 = vpop.f32.mrb[0].mxu0
      %v1651 = vadd.f32 %v1538, %v1650
      %1652 = vmatprep.mubr.bf16.mxu0 0
      %1653 = vmatmul.mubr.bf16.gmra.mrb[0].mxu0 %v1216
      %v1654 = vpop.f32.mrb[0].mxu0
      %v1655 = vadd.f32 %v1542, %v1654
      %v1656 = vpop.f32.mrb[0].mxu0
      %v1657 = vadd.f32 %v1544, %v1656
      %v1658 = vpop.f32.mrb[0].mxu0
      %v1659 = vadd.f32 %v1546, %v1658
      %v1660 = vpop.f32.mrb[0].mxu0
      %v1661 = vadd.f32 %v1548, %v1660
      %1662 = vmatprep.mubr.bf16.mxu0 0
      %1663 = vmatmul.mubr.bf16.gmra.mrb[0].mxu0 %v1219
      %v1664 = vpop.f32.mrb[0].mxu0
      %v1665 = vadd.f32 %v1552, %v1664
      %v1666 = vpop.f32.mrb[0].mxu0
      %v1667 = vadd.f32 %v1554, %v1666
      %v1668 = vpop.f32.mrb[0].mxu0
      %v1669 = vadd.f32 %v1556, %v1668
      %v1670 = vpop.f32.mrb[0].mxu0
      %v1671 = vadd.f32 %v1558, %v1670
      %1672 = vdwg.mxu0
      %vm1673 = vcmp.gt.f32.partialorder %v1595, 0.0
      %vm1674 = vcmp.gt.f32.partialorder %v1597, 0.0
      %vm1675 = vcmp.gt.f32.partialorder %v1599, 0.0
      %vm1676 = vcmp.gt.f32.partialorder %v1601, 0.0
      %vm1677 = vcmp.gt.f32.partialorder %v1605, 0.0
      %vm1678 = vcmp.gt.f32.partialorder %v1607, 0.0
      %vm1679 = vcmp.gt.f32.partialorder %v1609, 0.0
      %vm1680 = vcmp.gt.f32.partialorder %v1611, 0.0
      %vm1681 = vcmp.gt.f32.partialorder %v1615, 0.0
      %vm1682 = vcmp.gt.f32.partialorder %v1617, 0.0
      %vm1683 = vcmp.gt.f32.partialorder %v1619, 0.0
      %vm1684 = vcmp.gt.f32.partialorder %v1621, 0.0
      %vm1685 = vcmp.gt.f32.partialorder %v1625, 0.0
      %vm1686 = vcmp.gt.f32.partialorder %v1627, 0.0
      %vm1687 = vcmp.gt.f32.partialorder %v1629, 0.0
      %vm1688 = vcmp.gt.f32.partialorder %v1631, 0.0
      %vm1689 = vcmp.gt.f32.partialorder %v1635, 0.0
      %vm1690 = vcmp.gt.f32.partialorder %v1637, 0.0
      %vm1691 = vcmp.gt.f32.partialorder %v1639, 0.0
      %vm1692 = vcmp.gt.f32.partialorder %v1641, 0.0
      %vm1693 = vcmp.gt.f32.partialorder %v1645, 0.0
      %vm1694 = vcmp.gt.f32.partialorder %v1647, 0.0
      %vm1695 = vcmp.gt.f32.partialorder %v1649, 0.0
      %vm1696 = vcmp.gt.f32.partialorder %v1651, 0.0
      %vm1697 = vcmp.gt.f32.partialorder %v1655, 0.0
      %vm1698 = vcmp.gt.f32.partialorder %v1657, 0.0
      %vm1699 = vcmp.gt.f32.partialorder %v1659, 0.0
      %vm1700 = vcmp.gt.f32.partialorder %v1661, 0.0
      %vm1701 = vcmp.gt.f32.partialorder %v1665, 0.0
      %vm1702 = vcmp.gt.f32.partialorder %v1667, 0.0
      %vm1703 = vcmp.gt.f32.partialorder %v1669, 0.0
      %vm1704 = vcmp.gt.f32.partialorder %v1671, 0.0
      %v1705 = vmul.f32 %v1595, 0.01
      %v1706 = vmul.f32 %v1597, 0.01
      %v1707 = vmul.f32 %v1599, 0.01
      %v1708 = vmul.f32 %v1601, 0.01
      %v1709 = vmul.f32 %v1605, 0.01
      %v1710 = vmul.f32 %v1607, 0.01
      %v1711 = vmul.f32 %v1609, 0.01
      %v1712 = vmul.f32 %v1611, 0.01
      %v1713 = vmul.f32 %v1615, 0.01
      %v1714 = vmul.f32 %v1617, 0.01
      %v1715 = vmul.f32 %v1619, 0.01
      %v1716 = vmul.f32 %v1621, 0.01
      %v1717 = vmul.f32 %v1625, 0.01
      %v1718 = vmul.f32 %v1627, 0.01
      %v1719 = vmul.f32 %v1629, 0.01
      %v1720 = vmul.f32 %v1631, 0.01
      %v1721 = vmul.f32 %v1635, 0.01
      %v1722 = vmul.f32 %v1637, 0.01
      %v1723 = vmul.f32 %v1639, 0.01
      %v1724 = vmul.f32 %v1641, 0.01
      %v1725 = vmul.f32 %v1645, 0.01
      %v1726 = vmul.f32 %v1647, 0.01
      %v1727 = vmul.f32 %v1649, 0.01
      %v1728 = vmul.f32 %v1651, 0.01
      %v1729 = vmul.f32 %v1655, 0.01
      %v1730 = vmul.f32 %v1657, 0.01
      %v1731 = vmul.f32 %v1659, 0.01
      %v1732 = vmul.f32 %v1661, 0.01
      %v1733 = vmul.f32 %v1665, 0.01
      %v1734 = vmul.f32 %v1667, 0.01
      %v1735 = vmul.f32 %v1669, 0.01
      %v1736 = vmul.f32 %v1671, 0.01
      %v1737 = vsel %vm1673, %v1595, %v1705
      %v1738 = vsel %vm1674, %v1597, %v1706
      %v1739 = vsel %vm1675, %v1599, %v1707
      %v1740 = vsel %vm1676, %v1601, %v1708
      %v1741 = vsel %vm1677, %v1605, %v1709
      %v1742 = vsel %vm1678, %v1607, %v1710
      %v1743 = vsel %vm1679, %v1609, %v1711
      %v1744 = vsel %vm1680, %v1611, %v1712
      %v1745 = vsel %vm1681, %v1615, %v1713
      %v1746 = vsel %vm1682, %v1617, %v1714
      %v1747 = vsel %vm1683, %v1619, %v1715
      %v1748 = vsel %vm1684, %v1621, %v1716
      %v1749 = vsel %vm1685, %v1625, %v1717
      %v1750 = vsel %vm1686, %v1627, %v1718
      %v1751 = vsel %vm1687, %v1629, %v1719
      %v1752 = vsel %vm1688, %v1631, %v1720
      %v1753 = vsel %vm1689, %v1635, %v1721
      %v1754 = vsel %vm1690, %v1637, %v1722
      %v1755 = vsel %vm1691, %v1639, %v1723
      %v1756 = vsel %vm1692, %v1641, %v1724
      %v1757 = vsel %vm1693, %v1645, %v1725
      %v1758 = vsel %vm1694, %v1647, %v1726
      %v1759 = vsel %vm1695, %v1649, %v1727
      %v1760 = vsel %vm1696, %v1651, %v1728
      %v1761 = vsel %vm1697, %v1655, %v1729
      %v1762 = vsel %vm1698, %v1657, %v1730
      %v1763 = vsel %vm1699, %v1659, %v1731
      %v1764 = vsel %vm1700, %v1661, %v1732
      %v1765 = vsel %vm1701, %v1665, %v1733
      %v1766 = vsel %vm1702, %v1667, %v1734
      %v1767 = vsel %vm1703, %v1669, %v1735
      %v1768 = vsel %vm1704, %v1671, %v1736
      %v1769 = vld [vmem:[%s3] sm:$0x3]
      %v1771 = vlaneseq
      %v1772 = vshrl.u32 %v1771, 7
      %v1773 = vsub.s32 0, %v1772
      %v1774 = vrot.slane %v1769, %v1773
      %v1775 = vlaneseq
      %v1776 = vshrl.u32 %v1775, 7
      %v1777 = vsub.s32 1, %v1776
      %v1778 = vrot.slane %v1769, %v1777
      %v1781 = vmul.f32 %v1737, %v1774
      %v1782 = vmul.f32 %v1738, %v1778
      %v1783 = vmul.f32 %v1739, %v1774
      %v1784 = vmul.f32 %v1740, %v1778
      %v1785 = vmul.f32 %v1741, %v1774
      %v1786 = vmul.f32 %v1742, %v1778
      %v1787 = vmul.f32 %v1743, %v1774
      %v1788 = vmul.f32 %v1744, %v1778
      %v1789 = vmul.f32 %v1745, %v1774
      %v1790 = vmul.f32 %v1746, %v1778
      %v1791 = vmul.f32 %v1747, %v1774
      %v1792 = vmul.f32 %v1748, %v1778
      %v1793 = vmul.f32 %v1749, %v1774
      %v1794 = vmul.f32 %v1750, %v1778
      %v1795 = vmul.f32 %v1751, %v1774
      %v1796 = vmul.f32 %v1752, %v1778
      %v1797 = vmul.f32 %v1753, %v1774
      %v1798 = vmul.f32 %v1754, %v1778
      %v1799 = vmul.f32 %v1755, %v1774
      %v1800 = vmul.f32 %v1756, %v1778
      %v1801 = vmul.f32 %v1757, %v1774
      %v1802 = vmul.f32 %v1758, %v1778
      %v1803 = vmul.f32 %v1759, %v1774
      %v1804 = vmul.f32 %v1760, %v1778
      %v1805 = vmul.f32 %v1761, %v1774
      %v1806 = vmul.f32 %v1762, %v1778
      %v1807 = vmul.f32 %v1763, %v1774
      %v1808 = vmul.f32 %v1764, %v1778
      %v1809 = vmul.f32 %v1765, %v1774
      %v1810 = vmul.f32 %v1766, %v1778
      %v1811 = vmul.f32 %v1767, %v1774
      %v1812 = vmul.f32 %v1768, %v1778
      %vm1813 = vcmask 588800
      %v1814 = vsel %vm1813, %v1782, 0.0
      %v1815 = vadd.f32 %v1781, %v1814
      %1816 = vadd.xlane.f32.xlu0 %v1815
      %v1817 = vpop.xlane.xlu0 %1816
      %v1818 = vsel %vm1813, %v1784, 0.0
      %v1819 = vadd.f32 %v1783, %v1818
      %1820 = vadd.xlane.f32.xlu0 %v1819
      %v1821 = vpop.xlane.xlu0 %1820
      %v1822 = vsel %vm1813, %v1786, 0.0
      %v1823 = vadd.f32 %v1785, %v1822
      %1824 = vadd.xlane.f32.xlu0 %v1823
      %v1825 = vpop.xlane.xlu0 %1824
      %v1826 = vsel %vm1813, %v1788, 0.0
      %v1827 = vadd.f32 %v1787, %v1826
      %1828 = vadd.xlane.f32.xlu0 %v1827
      %v1829 = vpop.xlane.xlu0 %1828
      %v1830 = vsel %vm1813, %v1790, 0.0
      %v1831 = vadd.f32 %v1789, %v1830
      %1832 = vadd.xlane.f32.xlu0 %v1831
      %v1833 = vpop.xlane.xlu0 %1832
      %v1834 = vsel %vm1813, %v1792, 0.0
      %v1835 = vadd.f32 %v1791, %v1834
      %1836 = vadd.xlane.f32.xlu0 %v1835
      %v1837 = vpop.xlane.xlu0 %1836
      %v1838 = vsel %vm1813, %v1794, 0.0
      %v1839 = vadd.f32 %v1793, %v1838
      %1840 = vadd.xlane.f32.xlu0 %v1839
      %v1841 = vpop.xlane.xlu0 %1840
      %v1842 = vsel %vm1813, %v1796, 0.0
      %v1843 = vadd.f32 %v1795, %v1842
      %1844 = vadd.xlane.f32.xlu0 %v1843
      %v1845 = vpop.xlane.xlu0 %1844
      %v1846 = vsel %vm1813, %v1798, 0.0
      %v1847 = vadd.f32 %v1797, %v1846
      %1848 = vadd.xlane.f32.xlu0 %v1847
      %v1849 = vpop.xlane.xlu0 %1848
      %v1850 = vsel %vm1813, %v1800, 0.0
      %v1851 = vadd.f32 %v1799, %v1850
      %1852 = vadd.xlane.f32.xlu0 %v1851
      %v1853 = vpop.xlane.xlu0 %1852
      %v1854 = vsel %vm1813, %v1802, 0.0
      %v1855 = vadd.f32 %v1801, %v1854
      %1856 = vadd.xlane.f32.xlu0 %v1855
      %v1857 = vpop.xlane.xlu0 %1856
      %v1858 = vsel %vm1813, %v1804, 0.0
      %v1859 = vadd.f32 %v1803, %v1858
      %1860 = vadd.xlane.f32.xlu0 %v1859
      %v1861 = vpop.xlane.xlu0 %1860
      %v1862 = vsel %vm1813, %v1806, 0.0
      %v1863 = vadd.f32 %v1805, %v1862
      %1864 = vadd.xlane.f32.xlu0 %v1863
      %v1865 = vpop.xlane.xlu0 %1864
      %v1866 = vsel %vm1813, %v1808, 0.0
      %v1867 = vadd.f32 %v1807, %v1866
      %1868 = vadd.xlane.f32.xlu0 %v1867
      %v1869 = vpop.xlane.xlu0 %1868
      %v1870 = vsel %vm1813, %v1810, 0.0
      %v1871 = vadd.f32 %v1809, %v1870
      %1872 = vadd.xlane.f32.xlu0 %v1871
      %v1873 = vpop.xlane.xlu0 %1872
      %v1874 = vsel %vm1813, %v1812, 0.0
      %v1875 = vadd.f32 %v1811, %v1874
      %1876 = vadd.xlane.f32.xlu0 %v1875
      %v1877 = vpop.xlane.xlu0 %1876
      %s1878 = smul.u32 %s19, 128
      %s1879 = scalar_lea.vmem [#allocation2], %s1878
      %vm1880 = vcmask 7168
      %1881 = vst.msk [vmem:[%s1879] sm:$0xff] %vm1880, %v1817
      %1882 = vst.msk [vmem:[%s1879 + $0x8] sm:$0xff] %vm1880, %v1821
      %1883 = vst.msk [vmem:[%s1879 + $0x10] sm:$0xff] %vm1880, %v1825
      %1884 = vst.msk [vmem:[%s1879 + $0x18] sm:$0xff] %vm1880, %v1829
      %1885 = vst.msk [vmem:[%s1879 + $0x20] sm:$0xff] %vm1880, %v1833
      %1886 = vst.msk [vmem:[%s1879 + $0x28] sm:$0xff] %vm1880, %v1837
      %1887 = vst.msk [vmem:[%s1879 + $0x30] sm:$0xff] %vm1880, %v1841
      %1888 = vst.msk [vmem:[%s1879 + $0x38] sm:$0xff] %vm1880, %v1845
      %1889 = vst.msk [vmem:[%s1879 + $0x40] sm:$0xff] %vm1880, %v1849
      %1890 = vst.msk [vmem:[%s1879 + $0x48] sm:$0xff] %vm1880, %v1853
      %1891 = vst.msk [vmem:[%s1879 + $0x50] sm:$0xff] %vm1880, %v1857
      %1892 = vst.msk [vmem:[%s1879 + $0x58] sm:$0xff] %vm1880, %v1861
      %1893 = vst.msk [vmem:[%s1879 + $0x60] sm:$0xff] %vm1880, %v1865
      %1894 = vst.msk [vmem:[%s1879 + $0x68] sm:$0xff] %vm1880, %v1869
      %1895 = vst.msk [vmem:[%s1879 + $0x70] sm:$0xff] %vm1880, %v1873
      %1896 = vst.msk [vmem:[%s1879 + $0x78] sm:$0xff] %vm1880, %v1877
      %v1897 = vld [vmem:[#allocation3] sm:$0x1]
      %v1898 = vsel %vm1880, %v1817, 0.0
      %v1899 = vsel %vm1880, %v1821, 0.0
      %v1900 = vadd.f32 %v1898, %v1899
      %v1901 = vsel %vm1880, %v1825, 0.0
      %v1902 = vadd.f32 %v1900, %v1901
      %v1903 = vsel %vm1880, %v1829, 0.0
      %v1904 = vadd.f32 %v1902, %v1903
      %v1905 = vsel %vm1880, %v1833, 0.0
      %v1906 = vadd.f32 %v1904, %v1905
      %v1907 = vsel %vm1880, %v1837, 0.0
      %v1908 = vadd.f32 %v1906, %v1907
      %v1909 = vsel %vm1880, %v1841, 0.0
      %v1910 = vadd.f32 %v1908, %v1909
      %v1911 = vsel %vm1880, %v1845, 0.0
      %v1912 = vadd.f32 %v1910, %v1911
      %v1913 = vsel %vm1880, %v1849, 0.0
      %v1914 = vadd.f32 %v1912, %v1913
      %v1915 = vsel %vm1880, %v1853, 0.0
      %v1916 = vadd.f32 %v1914, %v1915
      %v1917 = vsel %vm1880, %v1857, 0.0
      %v1918 = vadd.f32 %v1916, %v1917
      %v1919 = vsel %vm1880, %v1861, 0.0
      %v1920 = vadd.f32 %v1918, %v1919
      %v1921 = vsel %vm1880, %v1865, 0.0
      %v1922 = vadd.f32 %v1920, %v1921
      %v1923 = vsel %vm1880, %v1869, 0.0
      %v1924 = vadd.f32 %v1922, %v1923
      %v1925 = vsel %vm1880, %v1873, 0.0
      %v1926 = vadd.f32 %v1924, %v1925
      %v1927 = vsel %vm1880, %v1877, 0.0
      %v1928 = vadd.f32 %v1926, %v1927
      %1929 = vadd.xlane.f32.xlu0 %v1928
      %v1930 = vpop.xlane.xlu0 %1929
      %v1931 = vrot.slane %v1930, 4
      %v1932 = vadd.f32 %v1930, %v1931
      %v1933 = vrot.slane %v1932, 2
      %v1934 = vadd.f32 %v1932, %v1933
      %v1935 = vrot.slane %v1934, 1
      %v1936 = vadd.f32 %v1934, %v1935
      %s1937 = vtos %v1936
      %v1938 = vstv %s1937
      %v1939 = vadd.f32 %v1897, %v1938
      %vm1940 = vcmask 0
      %1941 = vst.msk [vmem:[#allocation3] sm:$0x1] %vm1940, %v1939
      %v1942 = vld [vmem:[#allocation4] sm:$0x1]
      %v1943 = vmul.f32 %v1817, %v1817
      %v1944 = vmul.f32 %v1821, %v1821
      %v1945 = vmul.f32 %v1825, %v1825
      %v1946 = vmul.f32 %v1829, %v1829
      %v1947 = vmul.f32 %v1833, %v1833
      %v1948 = vmul.f32 %v1837, %v1837
      %v1949 = vmul.f32 %v1841, %v1841
      %v1950 = vmul.f32 %v1845, %v1845
      %v1951 = vmul.f32 %v1849, %v1849
      %v1952 = vmul.f32 %v1853, %v1853
      %v1953 = vmul.f32 %v1857, %v1857
      %v1954 = vmul.f32 %v1861, %v1861
      %v1955 = vmul.f32 %v1865, %v1865
      %v1956 = vmul.f32 %v1869, %v1869
      %v1957 = vmul.f32 %v1873, %v1873
      %v1958 = vmul.f32 %v1877, %v1877
      %v1959 = vsel %vm1880, %v1943, 0.0
      %v1960 = vsel %vm1880, %v1944, 0.0
      %v1961 = vadd.f32 %v1959, %v1960
      %v1962 = vsel %vm1880, %v1945, 0.0
      %v1963 = vadd.f32 %v1961, %v1962
      %v1964 = vsel %vm1880, %v1946, 0.0
      %v1965 = vadd.f32 %v1963, %v1964
      %v1966 = vsel %vm1880, %v1947, 0.0
      %v1967 = vadd.f32 %v1965, %v1966
      %v1968 = vsel %vm1880, %v1948, 0.0
      %v1969 = vadd.f32 %v1967, %v1968
      %v1970 = vsel %vm1880, %v1949, 0.0
      %v1971 = vadd.f32 %v1969, %v1970
      %v1972 = vsel %vm1880, %v1950, 0.0
      %v1973 = vadd.f32 %v1971, %v1972
      %v1974 = vsel %vm1880, %v1951, 0.0
      %v1975 = vadd.f32 %v1973, %v1974
      %v1976 = vsel %vm1880, %v1952, 0.0
      %v1977 = vadd.f32 %v1975, %v1976
      %v1978 = vsel %vm1880, %v1953, 0.0
      %v1979 = vadd.f32 %v1977, %v1978
      %v1980 = vsel %vm1880, %v1954, 0.0
      %v1981 = vadd.f32 %v1979, %v1980
      %v1982 = vsel %vm1880, %v1955, 0.0
      %v1983 = vadd.f32 %v1981, %v1982
      %v1984 = vsel %vm1880, %v1956, 0.0
      %v1985 = vadd.f32 %v1983, %v1984
      %v1986 = vsel %vm1880, %v1957, 0.0
      %v1987 = vadd.f32 %v1985, %v1986
      %v1988 = vsel %vm1880, %v1958, 0.0
      %v1989 = vadd.f32 %v1987, %v1988
      %1990 = vadd.xlane.f32.xlu0 %v1989
      %v1991 = vpop.xlane.xlu0 %1990
      %v1992 = vrot.slane %v1991, 4
      %v1993 = vadd.f32 %v1991, %v1992
      %v1994 = vrot.slane %v1993, 2
      %v1995 = vadd.f32 %v1993, %v1994
      %v1996 = vrot.slane %v1995, 1
      %v1997 = vadd.f32 %v1995, %v1996
      %s1998 = vtos %v1997
      %v1999 = vstv %s1998
      %v2000 = vadd.f32 %v1942, %v1999
      %2001 = vst.msk [vmem:[#allocation4] sm:$0x1] %vm1940, %v2000
      %p2002 = scmp.eq.s32.totalorder %s19, 3
      // Predicated region
      $region49: #{tpu_custom_call.1} parent=43 // pred_check
        %p2003 = pneg %p2002
      $region50: #{tpu_custom_call.1} parent=43 // pred_check_branch
        %2005 = sbr.rel (%p2003) target = $region52
      $region51: #{tpu_custom_call.1} parent=43 // pred_region
        %v2006 = vld [vmem:[#allocation3] sm:$0x1]
        %v2007 = vmul.f32 %v2006, 0.001953125
        %v2008 = vld [vmem:[#allocation4] sm:$0x1]
        %v2009 = vmul.f32 %v2008, 0.001953125
        %v2010 = vmul.f32 %v2007, %v2007
        %v2011 = vsub.f32 %v2009, %v2010
        %s2012 = sld [smem:[#allocation5]]
        %s2013 = sld [smem:[#allocation6]]
        %v2014 = vld [vmem:[#allocation2] sm:$0xff]
        %v2015 = vld [vmem:[#allocation2 + $0x8] sm:$0xff]
        %v2016 = vld [vmem:[#allocation2 + $0x10] sm:$0xff]
        %v2017 = vld [vmem:[#allocation2 + $0x18] sm:$0xff]
        %v2018 = vld [vmem:[#allocation2 + $0x20] sm:$0xff]
        %v2019 = vld [vmem:[#allocation2 + $0x28] sm:$0xff]
        %v2020 = vld [vmem:[#allocation2 + $0x30] sm:$0xff]
        %v2021 = vld [vmem:[#allocation2 + $0x38] sm:$0xff]
        %v2022 = vld [vmem:[#allocation2 + $0x40] sm:$0xff]
        %v2023 = vld [vmem:[#allocation2 + $0x48] sm:$0xff]
        %v2024 = vld [vmem:[#allocation2 + $0x50] sm:$0xff]
        %v2025 = vld [vmem:[#allocation2 + $0x58] sm:$0xff]
        %v2026 = vld [vmem:[#allocation2 + $0x60] sm:$0xff]
        %v2027 = vld [vmem:[#allocation2 + $0x68] sm:$0xff]
        %v2028 = vld [vmem:[#allocation2 + $0x70] sm:$0xff]
        %v2029 = vld [vmem:[#allocation2 + $0x78] sm:$0xff]
        %v2030 = vld [vmem:[#allocation2 + $0x80] sm:$0xff]
        %v2031 = vld [vmem:[#allocation2 + $0x88] sm:$0xff]
        %v2032 = vld [vmem:[#allocation2 + $0x90] sm:$0xff]
        %v2033 = vld [vmem:[#allocation2 + $0x98] sm:$0xff]
        %v2034 = vld [vmem:[#allocation2 + $0xa0] sm:$0xff]
        %v2035 = vld [vmem:[#allocation2 + $0xa8] sm:$0xff]
        %v2036 = vld [vmem:[#allocation2 + $0xb0] sm:$0xff]
        %v2037 = vld [vmem:[#allocation2 + $0xb8] sm:$0xff]
        %v2038 = vld [vmem:[#allocation2 + $0xc0] sm:$0xff]
        %v2039 = vld [vmem:[#allocation2 + $0xc8] sm:$0xff]
        %v2040 = vld [vmem:[#allocation2 + $0xd0] sm:$0xff]
        %v2041 = vld [vmem:[#allocation2 + $0xd8] sm:$0xff]
        %v2042 = vld [vmem:[#allocation2 + $0xe0] sm:$0xff]
        %v2043 = vld [vmem:[#allocation2 + $0xe8] sm:$0xff]
        %v2044 = vld [vmem:[#allocation2 + $0xf0] sm:$0xff]
        %v2045 = vld [vmem:[#allocation2 + $0xf8] sm:$0xff]
        %v2046 = vld [vmem:[#allocation2 + $0x100] sm:$0xff]
        %v2047 = vld [vmem:[#allocation2 + $0x108] sm:$0xff]
        %v2048 = vld [vmem:[#allocation2 + $0x110] sm:$0xff]
        %v2049 = vld [vmem:[#allocation2 + $0x118] sm:$0xff]
        %v2050 = vld [vmem:[#allocation2 + $0x120] sm:$0xff]
        %v2051 = vld [vmem:[#allocation2 + $0x128] sm:$0xff]
        %v2052 = vld [vmem:[#allocation2 + $0x130] sm:$0xff]
        %v2053 = vld [vmem:[#allocation2 + $0x138] sm:$0xff]
        %v2054 = vld [vmem:[#allocation2 + $0x140] sm:$0xff]
        %v2055 = vld [vmem:[#allocation2 + $0x148] sm:$0xff]
        %v2056 = vld [vmem:[#allocation2 + $0x150] sm:$0xff]
        %v2057 = vld [vmem:[#allocation2 + $0x158] sm:$0xff]
        %v2058 = vld [vmem:[#allocation2 + $0x160] sm:$0xff]
        %v2059 = vld [vmem:[#allocation2 + $0x168] sm:$0xff]
        %v2060 = vld [vmem:[#allocation2 + $0x170] sm:$0xff]
        %v2061 = vld [vmem:[#allocation2 + $0x178] sm:$0xff]
        %v2062 = vld [vmem:[#allocation2 + $0x180] sm:$0xff]
        %v2063 = vld [vmem:[#allocation2 + $0x188] sm:$0xff]
        %v2064 = vld [vmem:[#allocation2 + $0x190] sm:$0xff]
        %v2065 = vld [vmem:[#allocation2 + $0x198] sm:$0xff]
        %v2066 = vld [vmem:[#allocation2 + $0x1a0] sm:$0xff]
        %v2067 = vld [vmem:[#allocation2 + $0x1a8] sm:$0xff]
        %v2068 = vld [vmem:[#allocation2 + $0x1b0] sm:$0xff]
        %v2069 = vld [vmem:[#allocation2 + $0x1b8] sm:$0xff]
        %v2070 = vld [vmem:[#allocation2 + $0x1c0] sm:$0xff]
        %v2071 = vld [vmem:[#allocation2 + $0x1c8] sm:$0xff]
        %v2072 = vld [vmem:[#allocation2 + $0x1d0] sm:$0xff]
        %v2073 = vld [vmem:[#allocation2 + $0x1d8] sm:$0xff]
        %v2074 = vld [vmem:[#allocation2 + $0x1e0] sm:$0xff]
        %v2075 = vld [vmem:[#allocation2 + $0x1e8] sm:$0xff]
        %v2076 = vld [vmem:[#allocation2 + $0x1f0] sm:$0xff]
        %v2077 = vld [vmem:[#allocation2 + $0x1f8] sm:$0xff]
        %v2079 = vlaneseq
        %v2080 = vshrl.u32 %v2079, 7
        %v2081 = vsub.s32 0, %v2080
        %v2082 = vrot.slane %v2007, %v2081
        %v2084 = vsub.f32 %v2014, %v2082
        %v2085 = vsub.f32 %v2015, %v2082
        %v2086 = vsub.f32 %v2016, %v2082
        %v2087 = vsub.f32 %v2017, %v2082
        %v2088 = vsub.f32 %v2018, %v2082
        %v2089 = vsub.f32 %v2019, %v2082
        %v2090 = vsub.f32 %v2020, %v2082
        %v2091 = vsub.f32 %v2021, %v2082
        %v2092 = vsub.f32 %v2022, %v2082
        %v2093 = vsub.f32 %v2023, %v2082
        %v2094 = vsub.f32 %v2024, %v2082
        %v2095 = vsub.f32 %v2025, %v2082
        %v2096 = vsub.f32 %v2026, %v2082
        %v2097 = vsub.f32 %v2027, %v2082
        %v2098 = vsub.f32 %v2028, %v2082
        %v2099 = vsub.f32 %v2029, %v2082
        %v2100 = vsub.f32 %v2030, %v2082
        %v2101 = vsub.f32 %v2031, %v2082
        %v2102 = vsub.f32 %v2032, %v2082
        %v2103 = vsub.f32 %v2033, %v2082
        %v2104 = vsub.f32 %v2034, %v2082
        %v2105 = vsub.f32 %v2035, %v2082
        %v2106 = vsub.f32 %v2036, %v2082
        %v2107 = vsub.f32 %v2037, %v2082
        %v2108 = vsub.f32 %v2038, %v2082
        %v2109 = vsub.f32 %v2039, %v2082
        %v2110 = vsub.f32 %v2040, %v2082
        %v2111 = vsub.f32 %v2041, %v2082
        %v2112 = vsub.f32 %v2042, %v2082
        %v2113 = vsub.f32 %v2043, %v2082
        %v2114 = vsub.f32 %v2044, %v2082
        %v2115 = vsub.f32 %v2045, %v2082
        %v2116 = vsub.f32 %v2046, %v2082
        %v2117 = vsub.f32 %v2047, %v2082
        %v2118 = vsub.f32 %v2048, %v2082
        %v2119 = vsub.f32 %v2049, %v2082
        %v2120 = vsub.f32 %v2050, %v2082
        %v2121 = vsub.f32 %v2051, %v2082
        %v2122 = vsub.f32 %v2052, %v2082
        %v2123 = vsub.f32 %v2053, %v2082
        %v2124 = vsub.f32 %v2054, %v2082
        %v2125 = vsub.f32 %v2055, %v2082
        %v2126 = vsub.f32 %v2056, %v2082
        %v2127 = vsub.f32 %v2057, %v2082
        %v2128 = vsub.f32 %v2058, %v2082
        %v2129 = vsub.f32 %v2059, %v2082
        %v2130 = vsub.f32 %v2060, %v2082
        %v2131 = vsub.f32 %v2061, %v2082
        %v2132 = vsub.f32 %v2062, %v2082
        %v2133 = vsub.f32 %v2063, %v2082
        %v2134 = vsub.f32 %v2064, %v2082
        %v2135 = vsub.f32 %v2065, %v2082
        %v2136 = vsub.f32 %v2066, %v2082
        %v2137 = vsub.f32 %v2067, %v2082
        %v2138 = vsub.f32 %v2068, %v2082
        %v2139 = vsub.f32 %v2069, %v2082
        %v2140 = vsub.f32 %v2070, %v2082
        %v2141 = vsub.f32 %v2071, %v2082
        %v2142 = vsub.f32 %v2072, %v2082
        %v2143 = vsub.f32 %v2073, %v2082
        %v2144 = vsub.f32 %v2074, %v2082
        %v2145 = vsub.f32 %v2075, %v2082
        %v2146 = vsub.f32 %v2076, %v2082
        %v2147 = vsub.f32 %v2077, %v2082
        %v2148 = vadd.f32 %v2011, 1e-05
        %v2149 = vrsqrt.pop %v2148
        %v2151 = vlaneseq
        %v2152 = vshrl.u32 %v2151, 7
        %v2153 = vsub.s32 0, %v2152
        %v2154 = vrot.slane %v2149, %v2153
        %v2156 = vmul.f32 %v2084, %v2154
        %v2157 = vmul.f32 %v2085, %v2154
        %v2158 = vmul.f32 %v2086, %v2154
        %v2159 = vmul.f32 %v2087, %v2154
        %v2160 = vmul.f32 %v2088, %v2154
        %v2161 = vmul.f32 %v2089, %v2154
        %v2162 = vmul.f32 %v2090, %v2154
        %v2163 = vmul.f32 %v2091, %v2154
        %v2164 = vmul.f32 %v2092, %v2154
        %v2165 = vmul.f32 %v2093, %v2154
        %v2166 = vmul.f32 %v2094, %v2154
        %v2167 = vmul.f32 %v2095, %v2154
        %v2168 = vmul.f32 %v2096, %v2154
        %v2169 = vmul.f32 %v2097, %v2154
        %v2170 = vmul.f32 %v2098, %v2154
        %v2171 = vmul.f32 %v2099, %v2154
        %v2172 = vmul.f32 %v2100, %v2154
        %v2173 = vmul.f32 %v2101, %v2154
        %v2174 = vmul.f32 %v2102, %v2154
        %v2175 = vmul.f32 %v2103, %v2154
        %v2176 = vmul.f32 %v2104, %v2154
        %v2177 = vmul.f32 %v2105, %v2154
        %v2178 = vmul.f32 %v2106, %v2154
        %v2179 = vmul.f32 %v2107, %v2154
        %v2180 = vmul.f32 %v2108, %v2154
        %v2181 = vmul.f32 %v2109, %v2154
        %v2182 = vmul.f32 %v2110, %v2154
        %v2183 = vmul.f32 %v2111, %v2154
        %v2184 = vmul.f32 %v2112, %v2154
        %v2185 = vmul.f32 %v2113, %v2154
        %v2186 = vmul.f32 %v2114, %v2154
        %v2187 = vmul.f32 %v2115, %v2154
        %v2188 = vmul.f32 %v2116, %v2154
        %v2189 = vmul.f32 %v2117, %v2154
        %v2190 = vmul.f32 %v2118, %v2154
        %v2191 = vmul.f32 %v2119, %v2154
        %v2192 = vmul.f32 %v2120, %v2154
        %v2193 = vmul.f32 %v2121, %v2154
        %v2194 = vmul.f32 %v2122, %v2154
        %v2195 = vmul.f32 %v2123, %v2154
        %v2196 = vmul.f32 %v2124, %v2154
        %v2197 = vmul.f32 %v2125, %v2154
        %v2198 = vmul.f32 %v2126, %v2154
        %v2199 = vmul.f32 %v2127, %v2154
        %v2200 = vmul.f32 %v2128, %v2154
        %v2201 = vmul.f32 %v2129, %v2154
        %v2202 = vmul.f32 %v2130, %v2154
        %v2203 = vmul.f32 %v2131, %v2154
        %v2204 = vmul.f32 %v2132, %v2154
        %v2205 = vmul.f32 %v2133, %v2154
        %v2206 = vmul.f32 %v2134, %v2154
        %v2207 = vmul.f32 %v2135, %v2154
        %v2208 = vmul.f32 %v2136, %v2154
        %v2209 = vmul.f32 %v2137, %v2154
        %v2210 = vmul.f32 %v2138, %v2154
        %v2211 = vmul.f32 %v2139, %v2154
        %v2212 = vmul.f32 %v2140, %v2154
        %v2213 = vmul.f32 %v2141, %v2154
        %v2214 = vmul.f32 %v2142, %v2154
        %v2215 = vmul.f32 %v2143, %v2154
        %v2216 = vmul.f32 %v2144, %v2154
        %v2217 = vmul.f32 %v2145, %v2154
        %v2218 = vmul.f32 %v2146, %v2154
        %v2219 = vmul.f32 %v2147, %v2154
        %v2220 = vstv %s2012
        %v2221 = vmul.f32 %v2156, %v2220
        %v2222 = vmul.f32 %v2157, %v2220
        %v2223 = vmul.f32 %v2158, %v2220
        %v2224 = vmul.f32 %v2159, %v2220
        %v2225 = vmul.f32 %v2160, %v2220
        %v2226 = vmul.f32 %v2161, %v2220
        %v2227 = vmul.f32 %v2162, %v2220
        %v2228 = vmul.f32 %v2163, %v2220
        %v2229 = vmul.f32 %v2164, %v2220
        %v2230 = vmul.f32 %v2165, %v2220
        %v2231 = vmul.f32 %v2166, %v2220
        %v2232 = vmul.f32 %v2167, %v2220
        %v2233 = vmul.f32 %v2168, %v2220
        %v2234 = vmul.f32 %v2169, %v2220
        %v2235 = vmul.f32 %v2170, %v2220
        %v2236 = vmul.f32 %v2171, %v2220
        %v2237 = vmul.f32 %v2172, %v2220
        %v2238 = vmul.f32 %v2173, %v2220
        %v2239 = vmul.f32 %v2174, %v2220
        %v2240 = vmul.f32 %v2175, %v2220
        %v2241 = vmul.f32 %v2176, %v2220
        %v2242 = vmul.f32 %v2177, %v2220
        %v2243 = vmul.f32 %v2178, %v2220
        %v2244 = vmul.f32 %v2179, %v2220
        %v2245 = vmul.f32 %v2180, %v2220
        %v2246 = vmul.f32 %v2181, %v2220
        %v2247 = vmul.f32 %v2182, %v2220
        %v2248 = vmul.f32 %v2183, %v2220
        %v2249 = vmul.f32 %v2184, %v2220
        %v2250 = vmul.f32 %v2185, %v2220
        %v2251 = vmul.f32 %v2186, %v2220
        %v2252 = vmul.f32 %v2187, %v2220
        %v2253 = vmul.f32 %v2188, %v2220
        %v2254 = vmul.f32 %v2189, %v2220
        %v2255 = vmul.f32 %v2190, %v2220
        %v2256 = vmul.f32 %v2191, %v2220
        %v2257 = vmul.f32 %v2192, %v2220
        %v2258 = vmul.f32 %v2193, %v2220
        %v2259 = vmul.f32 %v2194, %v2220
        %v2260 = vmul.f32 %v2195, %v2220
        %v2261 = vmul.f32 %v2196, %v2220
        %v2262 = vmul.f32 %v2197, %v2220
        %v2263 = vmul.f32 %v2198, %v2220
        %v2264 = vmul.f32 %v2199, %v2220
        %v2265 = vmul.f32 %v2200, %v2220
        %v2266 = vmul.f32 %v2201, %v2220
        %v2267 = vmul.f32 %v2202, %v2220
        %v2268 = vmul.f32 %v2203, %v2220
        %v2269 = vmul.f32 %v2204, %v2220
        %v2270 = vmul.f32 %v2205, %v2220
        %v2271 = vmul.f32 %v2206, %v2220
        %v2272 = vmul.f32 %v2207, %v2220
        %v2273 = vmul.f32 %v2208, %v2220
        %v2274 = vmul.f32 %v2209, %v2220
        %v2275 = vmul.f32 %v2210, %v2220
        %v2276 = vmul.f32 %v2211, %v2220
        %v2277 = vmul.f32 %v2212, %v2220
        %v2278 = vmul.f32 %v2213, %v2220
        %v2279 = vmul.f32 %v2214, %v2220
        %v2280 = vmul.f32 %v2215, %v2220
        %v2281 = vmul.f32 %v2216, %v2220
        %v2282 = vmul.f32 %v2217, %v2220
        %v2283 = vmul.f32 %v2218, %v2220
        %v2284 = vmul.f32 %v2219, %v2220
        %v2285 = vstv %s2013
        %v2286 = vadd.f32 %v2221, %v2285
        %v2287 = vadd.f32 %v2222, %v2285
        %v2288 = vadd.f32 %v2223, %v2285
        %v2289 = vadd.f32 %v2224, %v2285
        %v2290 = vadd.f32 %v2225, %v2285
        %v2291 = vadd.f32 %v2226, %v2285
        %v2292 = vadd.f32 %v2227, %v2285
        %v2293 = vadd.f32 %v2228, %v2285
        %v2294 = vadd.f32 %v2229, %v2285
        %v2295 = vadd.f32 %v2230, %v2285
        %v2296 = vadd.f32 %v2231, %v2285
        %v2297 = vadd.f32 %v2232, %v2285
        %v2298 = vadd.f32 %v2233, %v2285
        %v2299 = vadd.f32 %v2234, %v2285
        %v2300 = vadd.f32 %v2235, %v2285
        %v2301 = vadd.f32 %v2236, %v2285
        %v2302 = vadd.f32 %v2237, %v2285
        %v2303 = vadd.f32 %v2238, %v2285
        %v2304 = vadd.f32 %v2239, %v2285
        %v2305 = vadd.f32 %v2240, %v2285
        %v2306 = vadd.f32 %v2241, %v2285
        %v2307 = vadd.f32 %v2242, %v2285
        %v2308 = vadd.f32 %v2243, %v2285
        %v2309 = vadd.f32 %v2244, %v2285
        %v2310 = vadd.f32 %v2245, %v2285
        %v2311 = vadd.f32 %v2246, %v2285
        %v2312 = vadd.f32 %v2247, %v2285
        %v2313 = vadd.f32 %v2248, %v2285
        %v2314 = vadd.f32 %v2249, %v2285
        %v2315 = vadd.f32 %v2250, %v2285
        %v2316 = vadd.f32 %v2251, %v2285
        %v2317 = vadd.f32 %v2252, %v2285
        %v2318 = vadd.f32 %v2253, %v2285
        %v2319 = vadd.f32 %v2254, %v2285
        %v2320 = vadd.f32 %v2255, %v2285
        %v2321 = vadd.f32 %v2256, %v2285
        %v2322 = vadd.f32 %v2257, %v2285
        %v2323 = vadd.f32 %v2258, %v2285
        %v2324 = vadd.f32 %v2259, %v2285
        %v2325 = vadd.f32 %v2260, %v2285
        %v2326 = vadd.f32 %v2261, %v2285
        %v2327 = vadd.f32 %v2262, %v2285
        %v2328 = vadd.f32 %v2263, %v2285
        %v2329 = vadd.f32 %v2264, %v2285
        %v2330 = vadd.f32 %v2265, %v2285
        %v2331 = vadd.f32 %v2266, %v2285
        %v2332 = vadd.f32 %v2267, %v2285
        %v2333 = vadd.f32 %v2268, %v2285
        %v2334 = vadd.f32 %v2269, %v2285
        %v2335 = vadd.f32 %v2270, %v2285
        %v2336 = vadd.f32 %v2271, %v2285
        %v2337 = vadd.f32 %v2272, %v2285
        %v2338 = vadd.f32 %v2273, %v2285
        %v2339 = vadd.f32 %v2274, %v2285
        %v2340 = vadd.f32 %v2275, %v2285
        %v2341 = vadd.f32 %v2276, %v2285
        %v2342 = vadd.f32 %v2277, %v2285
        %v2343 = vadd.f32 %v2278, %v2285
        %v2344 = vadd.f32 %v2279, %v2285
        %v2345 = vadd.f32 %v2280, %v2285
        %v2346 = vadd.f32 %v2281, %v2285
        %v2347 = vadd.f32 %v2282, %v2285
        %v2348 = vadd.f32 %v2283, %v2285
        %v2349 = vadd.f32 %v2284, %v2285
        %v2350 = vsub.f32 0.0, %v2286
        %v2351 = vsub.f32 0.0, %v2287
        %v2352 = vsub.f32 0.0, %v2288
        %v2353 = vsub.f32 0.0, %v2289
        %v2354 = vsub.f32 0.0, %v2290
        %v2355 = vsub.f32 0.0, %v2291
        %v2356 = vsub.f32 0.0, %v2292
        %v2357 = vsub.f32 0.0, %v2293
        %v2358 = vsub.f32 0.0, %v2294
        %v2359 = vsub.f32 0.0, %v2295
        %v2360 = vsub.f32 0.0, %v2296
        %v2361 = vsub.f32 0.0, %v2297
        %v2362 = vsub.f32 0.0, %v2298
        %v2363 = vsub.f32 0.0, %v2299
        %v2364 = vsub.f32 0.0, %v2300
        %v2365 = vsub.f32 0.0, %v2301
        %v2366 = vsub.f32 0.0, %v2302
        %v2367 = vsub.f32 0.0, %v2303
        %v2368 = vsub.f32 0.0, %v2304
        %v2369 = vsub.f32 0.0, %v2305
        %v2370 = vsub.f32 0.0, %v2306
        %v2371 = vsub.f32 0.0, %v2307
        %v2372 = vsub.f32 0.0, %v2308
        %v2373 = vsub.f32 0.0, %v2309
        %v2374 = vsub.f32 0.0, %v2310
        %v2375 = vsub.f32 0.0, %v2311
        %v2376 = vsub.f32 0.0, %v2312
        %v2377 = vsub.f32 0.0, %v2313
        %v2378 = vsub.f32 0.0, %v2314
        %v2379 = vsub.f32 0.0, %v2315
        %v2380 = vsub.f32 0.0, %v2316
        %v2381 = vsub.f32 0.0, %v2317
        %v2382 = vsub.f32 0.0, %v2318
        %v2383 = vsub.f32 0.0, %v2319
        %v2384 = vsub.f32 0.0, %v2320
        %v2385 = vsub.f32 0.0, %v2321
        %v2386 = vsub.f32 0.0, %v2322
        %v2387 = vsub.f32 0.0, %v2323
        %v2388 = vsub.f32 0.0, %v2324
        %v2389 = vsub.f32 0.0, %v2325
        %v2390 = vsub.f32 0.0, %v2326
        %v2391 = vsub.f32 0.0, %v2327
        %v2392 = vsub.f32 0.0, %v2328
        %v2393 = vsub.f32 0.0, %v2329
        %v2394 = vsub.f32 0.0, %v2330
        %v2395 = vsub.f32 0.0, %v2331
        %v2396 = vsub.f32 0.0, %v2332
        %v2397 = vsub.f32 0.0, %v2333
        %v2398 = vsub.f32 0.0, %v2334
        %v2399 = vsub.f32 0.0, %v2335
        %v2400 = vsub.f32 0.0, %v2336
        %v2401 = vsub.f32 0.0, %v2337
        %v2402 = vsub.f32 0.0, %v2338
        %v2403 = vsub.f32 0.0, %v2339
        %v2404 = vsub.f32 0.0, %v2340
        %v2405 = vsub.f32 0.0, %v2341
        %v2406 = vsub.f32 0.0, %v2342
        %v2407 = vsub.f32 0.0, %v2343
        %v2408 = vsub.f32 0.0, %v2344
        %v2409 = vsub.f32 0.0, %v2345
        %v2410 = vsub.f32 0.0, %v2346
        %v2411 = vsub.f32 0.0, %v2347
        %v2412 = vsub.f32 0.0, %v2348
        %v2413 = vsub.f32 0.0, %v2349
        %v2414 = vmul.f32 %v2350, 1.442695
        %v2415 = vpow.pop %v2414
        %v2416 = vmul.f32 %v2351, 1.442695
        %v2417 = vpow.pop %v2416
        %v2418 = vmul.f32 %v2352, 1.442695
        %v2419 = vpow.pop %v2418
        %v2420 = vmul.f32 %v2353, 1.442695
        %v2421 = vpow.pop %v2420
        %v2422 = vmul.f32 %v2354, 1.442695
        %v2423 = vpow.pop %v2422
        %v2424 = vmul.f32 %v2355, 1.442695
        %v2425 = vpow.pop %v2424
        %v2426 = vmul.f32 %v2356, 1.442695
        %v2427 = vpow.pop %v2426
        %v2428 = vmul.f32 %v2357, 1.442695
        %v2429 = vpow.pop %v2428
        %v2430 = vmul.f32 %v2358, 1.442695
        %v2431 = vpow.pop %v2430
        %v2432 = vmul.f32 %v2359, 1.442695
        %v2433 = vpow.pop %v2432
        %v2434 = vmul.f32 %v2360, 1.442695
        %v2435 = vpow.pop %v2434
        %v2436 = vmul.f32 %v2361, 1.442695
        %v2437 = vpow.pop %v2436
        %v2438 = vmul.f32 %v2362, 1.442695
        %v2439 = vpow.pop %v2438
        %v2440 = vmul.f32 %v2363, 1.442695
        %v2441 = vpow.pop %v2440
        %v2442 = vmul.f32 %v2364, 1.442695
        %v2443 = vpow.pop %v2442
        %v2444 = vmul.f32 %v2365, 1.442695
        %v2445 = vpow.pop %v2444
        %v2446 = vmul.f32 %v2366, 1.442695
        %v2447 = vpow.pop %v2446
        %v2448 = vmul.f32 %v2367, 1.442695
        %v2449 = vpow.pop %v2448
        %v2450 = vmul.f32 %v2368, 1.442695
        %v2451 = vpow.pop %v2450
        %v2452 = vmul.f32 %v2369, 1.442695
        %v2453 = vpow.pop %v2452
        %v2454 = vmul.f32 %v2370, 1.442695
        %v2455 = vpow.pop %v2454
        %v2456 = vmul.f32 %v2371, 1.442695
        %v2457 = vpow.pop %v2456
        %v2458 = vmul.f32 %v2372, 1.442695
        %v2459 = vpow.pop %v2458
        %v2460 = vmul.f32 %v2373, 1.442695
        %v2461 = vpow.pop %v2460
        %v2462 = vmul.f32 %v2374, 1.442695
        %v2463 = vpow.pop %v2462
        %v2464 = vmul.f32 %v2375, 1.442695
        %v2465 = vpow.pop %v2464
        %v2466 = vmul.f32 %v2376, 1.442695
        %v2467 = vpow.pop %v2466
        %v2468 = vmul.f32 %v2377, 1.442695
        %v2469 = vpow.pop %v2468
        %v2470 = vmul.f32 %v2378, 1.442695
        %v2471 = vpow.pop %v2470
        %v2472 = vmul.f32 %v2379, 1.442695
        %v2473 = vpow.pop %v2472
        %v2474 = vmul.f32 %v2380, 1.442695
        %v2475 = vpow.pop %v2474
        %v2476 = vmul.f32 %v2381, 1.442695
        %v2477 = vpow.pop %v2476
        %v2478 = vmul.f32 %v2382, 1.442695
        %v2479 = vpow.pop %v2478
        %v2480 = vmul.f32 %v2383, 1.442695
        %v2481 = vpow.pop %v2480
        %v2482 = vmul.f32 %v2384, 1.442695
        %v2483 = vpow.pop %v2482
        %v2484 = vmul.f32 %v2385, 1.442695
        %v2485 = vpow.pop %v2484
        %v2486 = vmul.f32 %v2386, 1.442695
        %v2487 = vpow.pop %v2486
        %v2488 = vmul.f32 %v2387, 1.442695
        %v2489 = vpow.pop %v2488
        %v2490 = vmul.f32 %v2388, 1.442695
        %v2491 = vpow.pop %v2490
        %v2492 = vmul.f32 %v2389, 1.442695
        %v2493 = vpow.pop %v2492
        %v2494 = vmul.f32 %v2390, 1.442695
        %v2495 = vpow.pop %v2494
        %v2496 = vmul.f32 %v2391, 1.442695
        %v2497 = vpow.pop %v2496
        %v2498 = vmul.f32 %v2392, 1.442695
        %v2499 = vpow.pop %v2498
        %v2500 = vmul.f32 %v2393, 1.442695
        %v2501 = vpow.pop %v2500
        %v2502 = vmul.f32 %v2394, 1.442695
        %v2503 = vpow.pop %v2502
        %v2504 = vmul.f32 %v2395, 1.442695
        %v2505 = vpow.pop %v2504
        %v2506 = vmul.f32 %v2396, 1.442695
        %v2507 = vpow.pop %v2506
        %v2508 = vmul.f32 %v2397, 1.442695
        %v2509 = vpow.pop %v2508
        %v2510 = vmul.f32 %v2398, 1.442695
        %v2511 = vpow.pop %v2510
        %v2512 = vmul.f32 %v2399, 1.442695
        %v2513 = vpow.pop %v2512
        %v2514 = vmul.f32 %v2400, 1.442695
        %v2515 = vpow.pop %v2514
        %v2516 = vmul.f32 %v2401, 1.442695
        %v2517 = vpow.pop %v2516
        %v2518 = vmul.f32 %v2402, 1.442695
        %v2519 = vpow.pop %v2518
        %v2520 = vmul.f32 %v2403, 1.442695
        %v2521 = vpow.pop %v2520
        %v2522 = vmul.f32 %v2404, 1.442695
        %v2523 = vpow.pop %v2522
        %v2524 = vmul.f32 %v2405, 1.442695
        %v2525 = vpow.pop %v2524
        %v2526 = vmul.f32 %v2406, 1.442695
        %v2527 = vpow.pop %v2526
        %v2528 = vmul.f32 %v2407, 1.442695
        %v2529 = vpow.pop %v2528
        %v2530 = vmul.f32 %v2408, 1.442695
        %v2531 = vpow.pop %v2530
        %v2532 = vmul.f32 %v2409, 1.442695
        %v2533 = vpow.pop %v2532
        %v2534 = vmul.f32 %v2410, 1.442695
        %v2535 = vpow.pop %v2534
        %v2536 = vmul.f32 %v2411, 1.442695
        %v2537 = vpow.pop %v2536
        %v2538 = vmul.f32 %v2412, 1.442695
        %v2539 = vpow.pop %v2538
        %v2540 = vmul.f32 %v2413, 1.442695
        %v2541 = vpow.pop %v2540
        %v2542 = vadd.f32 %v2415, 1.0
        %v2543 = vadd.f32 %v2417, 1.0
        %v2544 = vadd.f32 %v2419, 1.0
        %v2545 = vadd.f32 %v2421, 1.0
        %v2546 = vadd.f32 %v2423, 1.0
        %v2547 = vadd.f32 %v2425, 1.0
        %v2548 = vadd.f32 %v2427, 1.0
        %v2549 = vadd.f32 %v2429, 1.0
        %v2550 = vadd.f32 %v2431, 1.0
        %v2551 = vadd.f32 %v2433, 1.0
        %v2552 = vadd.f32 %v2435, 1.0
        %v2553 = vadd.f32 %v2437, 1.0
        %v2554 = vadd.f32 %v2439, 1.0
        %v2555 = vadd.f32 %v2441, 1.0
        %v2556 = vadd.f32 %v2443, 1.0
        %v2557 = vadd.f32 %v2445, 1.0
        %v2558 = vadd.f32 %v2447, 1.0
        %v2559 = vadd.f32 %v2449, 1.0
        %v2560 = vadd.f32 %v2451, 1.0
        %v2561 = vadd.f32 %v2453, 1.0
        %v2562 = vadd.f32 %v2455, 1.0
        %v2563 = vadd.f32 %v2457, 1.0
        %v2564 = vadd.f32 %v2459, 1.0
        %v2565 = vadd.f32 %v2461, 1.0
        %v2566 = vadd.f32 %v2463, 1.0
        %v2567 = vadd.f32 %v2465, 1.0
        %v2568 = vadd.f32 %v2467, 1.0
        %v2569 = vadd.f32 %v2469, 1.0
        %v2570 = vadd.f32 %v2471, 1.0
        %v2571 = vadd.f32 %v2473, 1.0
        %v2572 = vadd.f32 %v2475, 1.0
        %v2573 = vadd.f32 %v2477, 1.0
        %v2574 = vadd.f32 %v2479, 1.0
        %v2575 = vadd.f32 %v2481, 1.0
        %v2576 = vadd.f32 %v2483, 1.0
        %v2577 = vadd.f32 %v2485, 1.0
        %v2578 = vadd.f32 %v2487, 1.0
        %v2579 = vadd.f32 %v2489, 1.0
        %v2580 = vadd.f32 %v2491, 1.0
        %v2581 = vadd.f32 %v2493, 1.0
        %v2582 = vadd.f32 %v2495, 1.0
        %v2583 = vadd.f32 %v2497, 1.0
        %v2584 = vadd.f32 %v2499, 1.0
        %v2585 = vadd.f32 %v2501, 1.0
        %v2586 = vadd.f32 %v2503, 1.0
        %v2587 = vadd.f32 %v2505, 1.0
        %v2588 = vadd.f32 %v2507, 1.0
        %v2589 = vadd.f32 %v2509, 1.0
        %v2590 = vadd.f32 %v2511, 1.0
        %v2591 = vadd.f32 %v2513, 1.0
        %v2592 = vadd.f32 %v2515, 1.0
        %v2593 = vadd.f32 %v2517, 1.0
        %v2594 = vadd.f32 %v2519, 1.0
        %v2595 = vadd.f32 %v2521, 1.0
        %v2596 = vadd.f32 %v2523, 1.0
        %v2597 = vadd.f32 %v2525, 1.0
        %v2598 = vadd.f32 %v2527, 1.0
        %v2599 = vadd.f32 %v2529, 1.0
        %v2600 = vadd.f32 %v2531, 1.0
        %v2601 = vadd.f32 %v2533, 1.0
        %v2602 = vadd.f32 %v2535, 1.0
        %v2603 = vadd.f32 %v2537, 1.0
        %v2604 = vadd.f32 %v2539, 1.0
        %v2605 = vadd.f32 %v2541, 1.0
        %v2606 = vrcp.pop %v2542
        %v2607 = vmul.f32 1.0, %v2606
        %v2608 = vrcp.pop %v2543
        %v2609 = vmul.f32 1.0, %v2608
        %v2610 = vrcp.pop %v2544
        %v2611 = vmul.f32 1.0, %v2610
        %v2612 = vrcp.pop %v2545
        %v2613 = vmul.f32 1.0, %v2612
        %v2614 = vrcp.pop %v2546
        %v2615 = vmul.f32 1.0, %v2614
        %v2616 = vrcp.pop %v2547
        %v2617 = vmul.f32 1.0, %v2616
        %v2618 = vrcp.pop %v2548
        %v2619 = vmul.f32 1.0, %v2618
        %v2620 = vrcp.pop %v2549
        %v2621 = vmul.f32 1.0, %v2620
        %v2622 = vrcp.pop %v2550
        %v2623 = vmul.f32 1.0, %v2622
        %v2624 = vrcp.pop %v2551
        %v2625 = vmul.f32 1.0, %v2624
        %v2626 = vrcp.pop %v2552
        %v2627 = vmul.f32 1.0, %v2626
        %v2628 = vrcp.pop %v2553
        %v2629 = vmul.f32 1.0, %v2628
        %v2630 = vrcp.pop %v2554
        %v2631 = vmul.f32 1.0, %v2630
        %v2632 = vrcp.pop %v2555
        %v2633 = vmul.f32 1.0, %v2632
        %v2634 = vrcp.pop %v2556
        %v2635 = vmul.f32 1.0, %v2634
        %v2636 = vrcp.pop %v2557
        %v2637 = vmul.f32 1.0, %v2636
        %v2638 = vrcp.pop %v2558
        %v2639 = vmul.f32 1.0, %v2638
        %v2640 = vrcp.pop %v2559
        %v2641 = vmul.f32 1.0, %v2640
        %v2642 = vrcp.pop %v2560
        %v2643 = vmul.f32 1.0, %v2642
        %v2644 = vrcp.pop %v2561
        %v2645 = vmul.f32 1.0, %v2644
        %v2646 = vrcp.pop %v2562
        %v2647 = vmul.f32 1.0, %v2646
        %v2648 = vrcp.pop %v2563
        %v2649 = vmul.f32 1.0, %v2648
        %v2650 = vrcp.pop %v2564
        %v2651 = vmul.f32 1.0, %v2650
        %v2652 = vrcp.pop %v2565
        %v2653 = vmul.f32 1.0, %v2652
        %v2654 = vrcp.pop %v2566
        %v2655 = vmul.f32 1.0, %v2654
        %v2656 = vrcp.pop %v2567
        %v2657 = vmul.f32 1.0, %v2656
        %v2658 = vrcp.pop %v2568
        %v2659 = vmul.f32 1.0, %v2658
        %v2660 = vrcp.pop %v2569
        %v2661 = vmul.f32 1.0, %v2660
        %v2662 = vrcp.pop %v2570
        %v2663 = vmul.f32 1.0, %v2662
        %v2664 = vrcp.pop %v2571
        %v2665 = vmul.f32 1.0, %v2664
        %v2666 = vrcp.pop %v2572
        %v2667 = vmul.f32 1.0, %v2666
        %v2668 = vrcp.pop %v2573
        %v2669 = vmul.f32 1.0, %v2668
        %v2670 = vrcp.pop %v2574
        %v2671 = vmul.f32 1.0, %v2670
        %v2672 = vrcp.pop %v2575
        %v2673 = vmul.f32 1.0, %v2672
        %v2674 = vrcp.pop %v2576
        %v2675 = vmul.f32 1.0, %v2674
        %v2676 = vrcp.pop %v2577
        %v2677 = vmul.f32 1.0, %v2676
        %v2678 = vrcp.pop %v2578
        %v2679 = vmul.f32 1.0, %v2678
        %v2680 = vrcp.pop %v2579
        %v2681 = vmul.f32 1.0, %v2680
        %v2682 = vrcp.pop %v2580
        %v2683 = vmul.f32 1.0, %v2682
        %v2684 = vrcp.pop %v2581
        %v2685 = vmul.f32 1.0, %v2684
        %v2686 = vrcp.pop %v2582
        %v2687 = vmul.f32 1.0, %v2686
        %v2688 = vrcp.pop %v2583
        %v2689 = vmul.f32 1.0, %v2688
        %v2690 = vrcp.pop %v2584
        %v2691 = vmul.f32 1.0, %v2690
        %v2692 = vrcp.pop %v2585
        %v2693 = vmul.f32 1.0, %v2692
        %v2694 = vrcp.pop %v2586
        %v2695 = vmul.f32 1.0, %v2694
        %v2696 = vrcp.pop %v2587
        %v2697 = vmul.f32 1.0, %v2696
        %v2698 = vrcp.pop %v2588
        %v2699 = vmul.f32 1.0, %v2698
        %v2700 = vrcp.pop %v2589
        %v2701 = vmul.f32 1.0, %v2700
        %v2702 = vrcp.pop %v2590
        %v2703 = vmul.f32 1.0, %v2702
        %v2704 = vrcp.pop %v2591
        %v2705 = vmul.f32 1.0, %v2704
        %v2706 = vrcp.pop %v2592
        %v2707 = vmul.f32 1.0, %v2706
        %v2708 = vrcp.pop %v2593
        %v2709 = vmul.f32 1.0, %v2708
        %v2710 = vrcp.pop %v2594
        %v2711 = vmul.f32 1.0, %v2710
        %v2712 = vrcp.pop %v2595
        %v2713 = vmul.f32 1.0, %v2712
        %v2714 = vrcp.pop %v2596
        %v2715 = vmul.f32 1.0, %v2714
        %v2716 = vrcp.pop %v2597
        %v2717 = vmul.f32 1.0, %v2716
        %v2718 = vrcp.pop %v2598
        %v2719 = vmul.f32 1.0, %v2718
        %v2720 = vrcp.pop %v2599
        %v2721 = vmul.f32 1.0, %v2720
        %v2722 = vrcp.pop %v2600
        %v2723 = vmul.f32 1.0, %v2722
        %v2724 = vrcp.pop %v2601
        %v2725 = vmul.f32 1.0, %v2724
        %v2726 = vrcp.pop %v2602
        %v2727 = vmul.f32 1.0, %v2726
        %v2728 = vrcp.pop %v2603
        %v2729 = vmul.f32 1.0, %v2728
        %v2730 = vrcp.pop %v2604
        %v2731 = vmul.f32 1.0, %v2730
        %v2732 = vrcp.pop %v2605
        %v2733 = vmul.f32 1.0, %v2732
        %2734 = vst.msk [vmem:[%s6] sm:$0xff] %vm1880, %v2607
        %2735 = vst.msk [vmem:[%s6 + $0x8] sm:$0xff] %vm1880, %v2609
        %2736 = vst.msk [vmem:[%s6 + $0x10] sm:$0xff] %vm1880, %v2611
        %2737 = vst.msk [vmem:[%s6 + $0x18] sm:$0xff] %vm1880, %v2613
        %2738 = vst.msk [vmem:[%s6 + $0x20] sm:$0xff] %vm1880, %v2615
        %2739 = vst.msk [vmem:[%s6 + $0x28] sm:$0xff] %vm1880, %v2617
        %2740 = vst.msk [vmem:[%s6 + $0x30] sm:$0xff] %vm1880, %v2619
        %2741 = vst.msk [vmem:[%s6 + $0x38] sm:$0xff] %vm1880, %v2621
        %2742 = vst.msk [vmem:[%s6 + $0x40] sm:$0xff] %vm1880, %v2623
        %2743 = vst.msk [vmem:[%s6 + $0x48] sm:$0xff] %vm1880, %v2625
        %2744 = vst.msk [vmem:[%s6 + $0x50] sm:$0xff] %vm1880, %v2627
        %2745 = vst.msk [vmem:[%s6 + $0x58] sm:$0xff] %vm1880, %v2629
        %2746 = vst.msk [vmem:[%s6 + $0x60] sm:$0xff] %vm1880, %v2631
        %2747 = vst.msk [vmem:[%s6 + $0x68] sm:$0xff] %vm1880, %v2633
        %2748 = vst.msk [vmem:[%s6 + $0x70] sm:$0xff] %vm1880, %v2635
        %2749 = vst.msk [vmem:[%s6 + $0x78] sm:$0xff] %vm1880, %v2637
        %2750 = vst.msk [vmem:[%s6 + $0x80] sm:$0xff] %vm1880, %v2639
        %2751 = vst.msk [vmem:[%s6 + $0x88] sm:$0xff] %vm1880, %v2641
        %2752 = vst.msk [vmem:[%s6 + $0x90] sm:$0xff] %vm1880, %v2643
        %2753 = vst.msk [vmem:[%s6 + $0x98] sm:$0xff] %vm1880, %v2645
        %2754 = vst.msk [vmem:[%s6 + $0xa0] sm:$0xff] %vm1880, %v2647
        %2755 = vst.msk [vmem:[%s6 + $0xa8] sm:$0xff] %vm1880, %v2649
        %2756 = vst.msk [vmem:[%s6 + $0xb0] sm:$0xff] %vm1880, %v2651
        %2757 = vst.msk [vmem:[%s6 + $0xb8] sm:$0xff] %vm1880, %v2653
        %2758 = vst.msk [vmem:[%s6 + $0xc0] sm:$0xff] %vm1880, %v2655
        %2759 = vst.msk [vmem:[%s6 + $0xc8] sm:$0xff] %vm1880, %v2657
        %2760 = vst.msk [vmem:[%s6 + $0xd0] sm:$0xff] %vm1880, %v2659
        %2761 = vst.msk [vmem:[%s6 + $0xd8] sm:$0xff] %vm1880, %v2661
        %2762 = vst.msk [vmem:[%s6 + $0xe0] sm:$0xff] %vm1880, %v2663
        %2763 = vst.msk [vmem:[%s6 + $0xe8] sm:$0xff] %vm1880, %v2665
        %2764 = vst.msk [vmem:[%s6 + $0xf0] sm:$0xff] %vm1880, %v2667
        %2765 = vst.msk [vmem:[%s6 + $0xf8] sm:$0xff] %vm1880, %v2669
        %2766 = vst.msk [vmem:[%s6 + $0x100] sm:$0xff] %vm1880, %v2671
        %2767 = vst.msk [vmem:[%s6 + $0x108] sm:$0xff] %vm1880, %v2673
        %2768 = vst.msk [vmem:[%s6 + $0x110] sm:$0xff] %vm1880, %v2675
        %2769 = vst.msk [vmem:[%s6 + $0x118] sm:$0xff] %vm1880, %v2677
        %2770 = vst.msk [vmem:[%s6 + $0x120] sm:$0xff] %vm1880, %v2679
        %2771 = vst.msk [vmem:[%s6 + $0x128] sm:$0xff] %vm1880, %v2681
        %2772 = vst.msk [vmem:[%s6 + $0x130] sm:$0xff] %vm1880, %v2683
        %2773 = vst.msk [vmem:[%s6 + $0x138] sm:$0xff] %vm1880, %v2685
        %2774 = vst.msk [vmem:[%s6 + $0x140] sm:$0xff] %vm1880, %v2687
        %2775 = vst.msk [vmem:[%s6 + $0x148] sm:$0xff] %vm1880, %v2689
        %2776 = vst.msk [vmem:[%s6 + $0x150] sm:$0xff] %vm1880, %v2691
        %2777 = vst.msk [vmem:[%s6 + $0x158] sm:$0xff] %vm1880, %v2693
        %2778 = vst.msk [vmem:[%s6 + $0x160] sm:$0xff] %vm1880, %v2695
        %2779 = vst.msk [vmem:[%s6 + $0x168] sm:$0xff] %vm1880, %v2697
        %2780 = vst.msk [vmem:[%s6 + $0x170] sm:$0xff] %vm1880, %v2699
        %2781 = vst.msk [vmem:[%s6 + $0x178] sm:$0xff] %vm1880, %v2701
        %2782 = vst.msk [vmem:[%s6 + $0x180] sm:$0xff] %vm1880, %v2703
        %2783 = vst.msk [vmem:[%s6 + $0x188] sm:$0xff] %vm1880, %v2705
        %2784 = vst.msk [vmem:[%s6 + $0x190] sm:$0xff] %vm1880, %v2707
        %2785 = vst.msk [vmem:[%s6 + $0x198] sm:$0xff] %vm1880, %v2709
        %2786 = vst.msk [vmem:[%s6 + $0x1a0] sm:$0xff] %vm1880, %v2711
        %2787 = vst.msk [vmem:[%s6 + $0x1a8] sm:$0xff] %vm1880, %v2713
        %2788 = vst.msk [vmem:[%s6 + $0x1b0] sm:$0xff] %vm1880, %v2715
        %2789 = vst.msk [vmem:[%s6 + $0x1b8] sm:$0xff] %vm1880, %v2717
        %2790 = vst.msk [vmem:[%s6 + $0x1c0] sm:$0xff] %vm1880, %v2719
        %2791 = vst.msk [vmem:[%s6 + $0x1c8] sm:$0xff] %vm1880, %v2721
        %2792 = vst.msk [vmem:[%s6 + $0x1d0] sm:$0xff] %vm1880, %v2723
        %2793 = vst.msk [vmem:[%s6 + $0x1d8] sm:$0xff] %vm1880, %v2725
        %2794 = vst.msk [vmem:[%s6 + $0x1e0] sm:$0xff] %vm1880, %v2727
        %2795 = vst.msk [vmem:[%s6 + $0x1e8] sm:$0xff] %vm1880, %v2729
        %2796 = vst.msk [vmem:[%s6 + $0x1f0] sm:$0xff] %vm1880, %v2731
        %2797 = vst.msk [vmem:[%s6 + $0x1f8] sm:$0xff] %vm1880, %v2733
      $region52: #{tpu_custom_call.1} parent=43 // pred_fallthru
        _
      // Predicated region
      $region53: #{tpu_custom_call.1} parent=43 // pred_check
        %p2798 = pneg %p163
      $region54: #{tpu_custom_call.1} parent=43 // pred_check_branch
        %2800 = sbr.rel (%p2798) target = $region56
      $region55: #{tpu_custom_call.1} parent=43 // pred_region
        _
      $region56: #{tpu_custom_call.1} parent=43 // pred_fallthru
        _
      // Predicated region
      $region57: #{tpu_custom_call.1} parent=43 // pred_check
        %p2801 = pneg %p163
      $region58: #{tpu_custom_call.1} parent=43 // pred_check_branch
        %2803 = sbr.rel (%p2801) target = $region60
      $region59: #{tpu_custom_call.1} parent=43 // pred_region
        _
      $region60: #{tpu_custom_call.1} parent=43 // pred_fallthru
        _
    $region44: #{tpu_custom_call.1} parent=5 // pred_fallthru
      _
    %p2804 = scmp.le.s32.totalorder 2, %s14
    // Predicated region
    $region61: #{tpu_custom_call.1} parent=5 // pred_check
      %p2805 = pneg %p2804
    $region62: #{tpu_custom_call.1} parent=5 // pred_check_branch
      %2807 = sbr.rel (%p2805) target = $region64
    $region63: #{tpu_custom_call.1} parent=5 // pred_region
      %s2808 = ssub.s32 %s14, 2
    $region64: #{tpu_custom_call.1} parent=5 // pred_fallthru
      _
  $region6: #{tpu_custom_call.1} parent=0 // loop_footer
    %s18 = sadd.s32 1, %s14
  $region7: #{tpu_custom_call.1} parent=0 // loop_footer_branch
    %13 = sbr.rel target = $region3
  $region8: #{tpu_custom_call.1} parent=0 // loop_exit
    _

</llo_original>
